<compile_context>
chip_gen: v7x
topology: tpu7x:2x2x1
jax: 0.10.0
libtpu: 0.0.40
codegen_flags: <defaults>
</compile_context>

<pallas_src>
import functools

import jax
import jax.numpy as jnp
from jax import lax
from jax.experimental import pallas as pl
from jax.experimental.pallas import tpu as pltpu


_ONES_LANE_DRIVE = 30.0  # tanh(30.0) == 1.0 in f32 -> the "ones" lane of h stays 1.0


def _round_up(x, m):
    return ((x + m - 1) // m) * m


def gru_chunk_kernel(x_ref, h0_ref, wih_ref, whh_ref, bhhn_ref,
                     out_ref, h_carry, gi_buf, *, unroll, fold_n_bias):
    """One sequence chunk of a single-layer GRU (PyTorch gate order r, z, n).

    x_ref    : (T, B, Ip)   bf16 time-major inputs; last column is constant 1.0
                            (carries all input-side biases through W_ih).
    h0_ref   : (1, B, Hp)   f32 initial hidden (consumed only at chunk 0).
    wih_ref  : (Ip, 3*Hp)   bf16 [W_ih^T ; bias row], gate blocks lane-aligned.
    whh_ref  : (Hp, 3*Hp)   bf16 W_hh^T (+ b_hh_n on the "ones" row when
                            fold_n_bias), gate blocks lane-aligned.
    bhhn_ref : (1, Hp)      f32 b_hh_n; only read when fold_n_bias is False.
    out_ref  : (T, B, Hp)   bf16 hidden states for this chunk.
    h_carry  : (B, Hp)      f32 VMEM scratch carried across sequence chunks.
    gi_buf   : (T, B, 3*Hp) f32 VMEM scratch for the hoisted input projection.

    INVARIANT: the sequence axis must stay the innermost "arbitrary" grid axis
    (and must never be split across cores) — h_carry is per-core state carried
    between consecutive chunks.
    """
    c = pl.program_id(1)
    T, B, Ip = x_ref.shape
    Hp = h_carry.shape[-1]

    @pl.when(c == 0)
    def _():
        h_carry[...] = h0_ref[0]

    # Hoisted input projection: one lane-dense MXU matmul per chunk.  All
    # input-side biases ride in the constant-1 column of x, so no adds here.
    x_flat = x_ref[...].reshape(T * B, Ip)           # layout-free (B % 16 == 0)
    gi = jnp.dot(x_flat, wih_ref[...], preferred_element_type=jnp.float32)
    gi_buf[...] = gi.reshape(T, B, 3 * Hp)

    whh = whh_ref[...]
    if not fold_n_bias:
        bhh_n = jnp.broadcast_to(bhhn_ref[...], (B, Hp))   # hoisted out of loop

    # Serial recurrence: only h @ W_hh^T + gate elementwise math per step.
    def step(t, h):
        gi_t = gi_buf[t]                                    # (B, 3Hp) f32
        gh = jnp.dot(h.astype(whh.dtype), whh,
                     preferred_element_type=jnp.float32)    # (B, 3Hp) f32
        r = jax.nn.sigmoid(gi_t[:, 0:Hp] + gh[:, 0:Hp])
        z = jax.nn.sigmoid(gi_t[:, Hp:2 * Hp] + gh[:, Hp:2 * Hp])
        gh_n = gh[:, 2 * Hp:]
        if not fold_n_bias:
            gh_n = gh_n + bhh_n
        n = jnp.tanh(gi_t[:, 2 * Hp:] + r * gh_n)
        h_new = n + z * (h - n)                             # == (1-z)*n + z*h
        out_ref[t] = h_new.astype(out_ref.dtype)            # packed bf16 store
        return h_new

    h_carry[...] = lax.fori_loop(0, T, step, h_carry[...], unroll=unroll)


def _pack_gate_blocks(w, n_rows, rows_pad, h, h_pad):
    """PyTorch (3h, n_rows) gate-stacked weight -> f32 (rows_pad, 3*h_pad):
    transposed, each gate block lane-aligned at g*h_pad, zero padding."""
    out = jnp.zeros((rows_pad, 3 * h_pad), jnp.float32)
    for g in range(3):
        out = out.at[:n_rows, g * h_pad:g * h_pad + h].set(
            w[g * h:(g + 1) * h, :].T.astype(jnp.float32))
    return out


def encoder_rnn_forward(inp, hidden, w_ih, w_hh, b_ih, b_hh,
                        *, t_chunk=32, unroll=8):
    """Mirrors EncoderRNN.forward.

    inp    : (batch, seq, input_size)   -- batch-first, as the module receives it
    hidden : (batch, 1, hidden_size)
    returns (output, hidden) = ((seq, batch, H), (1, batch, H)), like nn.GRU
    after the module's internal permutes.
    """
    B, S, I = inp.shape
    H = w_hh.shape[1]
    assert w_ih.shape == (3 * H, I) and w_hh.shape == (3 * H, H)

    mm_dtype = jnp.bfloat16           # MXU-native operands; f32 accumulation
    out_dtype = jnp.bfloat16          # halves output HBM writeback / vst work

    Hp = _round_up(H, 128)            # lane-aligned gate blocks & stores
    fold_n = Hp > H                   # spare lane available to carry b_hh_n
    ones_lane = H                     # padding lane pinned to 1.0 when fold_n
    Ip = I + 1                        # +1: constant-1 column carrying the input biases

    # Batch: one tile covering the 16-aligned batch (bf16 sublane packing),
    # capped at 128 rows so v5e's 128-row MXU stays full and larger batches
    # get >= 2 "parallel" tiles (keeps v7x's second TensorCore busy).
    B16 = _round_up(B, 16)
    b_tile = min(B16, 128)
    Bp = _round_up(B, b_tile)

    t_chunk = max(1, min(t_chunk, S))
    Sp = _round_up(S, t_chunk)
    unroll = max(1, min(unroll, t_chunk))

    # --- Inputs: time-major, zero-padded, bf16, with a constant-1 bias column.
    x_p = jnp.zeros((Sp, Bp, Ip), mm_dtype)
    x_p = x_p.at[:S, :B, :I].set(jnp.transpose(inp, (1, 0, 2)).astype(mm_dtype))
    x_p = x_p.at[:, :, I].set(1.0)

    h0_p = jnp.zeros((1, Bp, Hp), jnp.float32)
    h0_p = h0_p.at[:, :B, :H].set(
        jnp.transpose(hidden, (1, 0, 2)).astype(jnp.float32))
    if fold_n:
        h0_p = h0_p.at[:, :, ones_lane].set(1.0)   # self-sustaining "ones" lane

    # --- Weights: transposed, gate-blocked, zero-padded, bf16, biases folded.
    bih = b_ih.astype(jnp.float32)
    bhh = b_hh.astype(jnp.float32)

    wih_f = _pack_gate_blocks(w_ih, I, Ip, H, Hp)
    # Bias row (multiplied by the constant-1 column of x): r/z get b_ih + b_hh,
    # n gets b_ih only (b_hh_n must stay inside the r * (...) term).
    wih_f = wih_f.at[I, 0:H].set(bih[0:H] + bhh[0:H])
    wih_f = wih_f.at[I, Hp:Hp + H].set(bih[H:2 * H] + bhh[H:2 * H])
    wih_f = wih_f.at[I, 2 * Hp:2 * Hp + H].set(bih[2 * H:3 * H])
    if fold_n:
        # Drive the n-gate pre-activation of the "ones" lane to +30 so that
        # tanh -> 1.0 and h[ones_lane] stays exactly 1.0 every step.
        wih_f = wih_f.at[I, 2 * Hp + ones_lane].set(_ONES_LANE_DRIVE)
    wih_t = wih_f.astype(mm_dtype)

    whh_f = _pack_gate_blocks(w_hh, H, Hp, H, Hp)
    if fold_n:
        # b_hh_n rides on the "ones" lane of h through the recurrent matmul,
        # removing the per-step "+ b_hh_n" add from the serial critical path.
        whh_f = whh_f.at[ones_lane, 2 * Hp:2 * Hp + H].set(bhh[2 * H:3 * H])
    whh_t = whh_f.astype(mm_dtype)

    bhhn = jnp.zeros((1, Hp), jnp.float32)
    if not fold_n:
        bhhn = bhhn.at[0, :H].set(bhh[2 * H:3 * H])

    grid = (Bp // b_tile, Sp // t_chunk)   # (parallel batch tiles, serial seq chunks)

    # Explicit VMEM budget (double-buffered pipeline blocks + scratch) so the
    # larger tiles aren't rejected by the scoped default (16 MiB v5e / 32 MiB
    # v6e/v7x).  NOTE(v7x, 64 MiB physical): keep this under ~48 MiB — halve
    # t_chunk or store gi_buf in bf16 for very large H.
    vmem_need = (
        2 * t_chunk * b_tile * Ip * 2          # x blocks (bf16, double buffered)
        + 2 * b_tile * Hp * 4                  # h0 block (f32)
        + 2 * Ip * 3 * Hp * 2                  # W_ih^T (bf16)
        + 2 * Hp * 3 * Hp * 2                  # W_hh^T (bf16)
        + 2 * Hp * 4                           # b_hh_n (f32)
        + 2 * t_chunk * b_tile * Hp * 2        # out blocks (bf16, double buffered)
        + b_tile * Hp * 4                      # h_carry scratch
        + t_chunk * b_tile * 3 * Hp * 4        # gi_buf scratch
    )
    vmem_limit = int(min(max(int(vmem_need * 1.3) + (4 << 20), 32 << 20), 110 << 20))

    cost = pl.CostEstimate(
        flops=2 * Sp * Bp * (Ip + Hp) * 3 * Hp,
        transcendentals=3 * Sp * Bp * Hp,
        bytes_accessed=(Sp * Bp * Ip * 2 + Sp * Bp * Hp * 2
                        + Ip * 3 * Hp * 2 + Hp * 3 * Hp * 2
                        + (Hp + Bp * Hp) * 4),
    )

    kernel = functools.partial(gru_chunk_kernel, unroll=unroll, fold_n_bias=fold_n)

    out_p = pl.pallas_call(
        kernel,
        out_shape=jax.ShapeDtypeStruct((Sp, Bp, Hp), out_dtype),
        grid_spec=pltpu.PrefetchScalarGridSpec(
            num_scalar_prefetch=0,
            grid=grid,
            in_specs=[
                pl.BlockSpec((t_chunk, b_tile, Ip), lambda b, c: (c, b, 0)),
                pl.BlockSpec((1, b_tile, Hp), lambda b, c: (0, b, 0)),
                pl.BlockSpec((Ip, 3 * Hp), lambda b, c: (0, 0)),
                pl.BlockSpec((Hp, 3 * Hp), lambda b, c: (0, 0)),
                pl.BlockSpec((1, Hp), lambda b, c: (0, 0)),
            ],
            out_specs=pl.BlockSpec((t_chunk, b_tile, Hp),
                                   lambda b, c: (c, b, 0)),
            scratch_shapes=[
                pltpu.VMEM((b_tile, Hp), jnp.float32),               # h carry
                pltpu.VMEM((t_chunk, b_tile, 3 * Hp), jnp.float32),  # input proj
            ],
        ),
        compiler_params=pltpu.CompilerParams(
            dimension_semantics=("parallel", "arbitrary"),
            vmem_limit_bytes=vmem_limit),
        cost_estimate=cost,
    )(x_p, h0_p, wih_t, whh_t, bhhn)

    output = out_p
    if (Sp, Bp, Hp) != (S, B, H):
        output = output[:S, :B, :H]               # strip seq/batch/hidden padding
    if output.dtype != inp.dtype:
        output = output.astype(inp.dtype)
    # Single-layer unidirectional GRU: final hidden state == last output step.
    hT = output[S - 1:S]
    return output, hT


def gru_reference(inp, hidden, w_ih, w_hh, b_ih, b_hh):
    """Pure-JAX f32 reference of PyTorch nn.GRU (gate order r, z, n)."""
    x = jnp.transpose(inp, (1, 0, 2))
    h = jnp.transpose(hidden, (1, 0, 2))[0]
    H = w_hh.shape[1]
    outs = []
    for t in range(x.shape[0]):
        gi = x[t] @ w_ih.T + b_ih
        gh = h @ w_hh.T + b_hh
        r = jax.nn.sigmoid(gi[:, :H] + gh[:, :H])
        z = jax.nn.sigmoid(gi[:, H:2 * H] + gh[:, H:2 * H])
        n = jnp.tanh(gi[:, 2 * H:] + r * gh[:, 2 * H:])
        h = (1.0 - z) * n + z * h
        outs.append(h)
    return jnp.stack(outs, axis=0), h[None]


if __name__ == "__main__":
    # Small shapes consistent with the module: GRU(input_size, hidden_size).
    batch, seq, input_size, hidden_size = 2, 8, 16, 32

    key = jax.random.PRNGKey(0)
    k_x, k_h, k_wih, k_whh, k_bih, k_bhh = jax.random.split(key, 6)

    # PyTorch-style uniform(-1/sqrt(H), 1/sqrt(H)) init for GRU params.
    bound = 1.0 / (hidden_size ** 0.5)
    w_ih = jax.random.uniform(k_wih, (3 * hidden_size, input_size),
                              jnp.float32, -bound, bound)
    w_hh = jax.random.uniform(k_whh, (3 * hidden_size, hidden_size),
                              jnp.float32, -bound, bound)
    b_ih = jax.random.uniform(k_bih, (3 * hidden_size,), jnp.float32, -bound, bound)
    b_hh = jax.random.uniform(k_bhh, (3 * hidden_size,), jnp.float32, -bound, bound)

    # Inputs as the PyTorch module expects them *before* its internal permute:
    # input: (batch, seq, input_size), hidden: (batch, 1, hidden_size).
    x_in = jax.random.normal(k_x, (batch, seq, input_size), jnp.float32)
    h_in = jax.random.normal(k_h, (batch, 1, hidden_size), jnp.float32)

    out, h_T = encoder_rnn_forward(x_in, h_in, w_ih, w_hh, b_ih, b_hh)
    out = jax.block_until_ready(out)
    h_T = jax.block_until_ready(h_T)

    # Correctness check against a pure-JAX f32 GRU reference (kernel matmuls
    # and the output writeback are bf16, hence the looser tolerance).
    out_ref, h_ref = gru_reference(x_in, h_in, w_ih, w_hh, b_ih, b_hh)
    assert out.shape == (seq, batch, hidden_size)
    assert h_T.shape == (1, batch, hidden_size)
    assert jnp.allclose(out, out_ref, atol=4e-2, rtol=4e-2)
    assert jnp.allclose(h_T, h_ref, atol=4e-2, rtol=4e-2)

    print("KERNEL_OK")
</pallas_src>

<mosaic_0001>
module attributes {stable_mosaic.version = 11 : i64} {
  func.func @gru_chunk_kernel(%arg0: i32, %arg1: i32, %arg2: memref<8x16x17xbf16, #tpu.memory_space<vmem>>, %arg3: memref<1x16x128xf32, #tpu.memory_space<vmem>>, %arg4: memref<17x384xbf16, #tpu.memory_space<vmem>>, %arg5: memref<128x384xbf16, #tpu.memory_space<vmem>>, %arg6: memref<1x128xf32, #tpu.memory_space<vmem>>, %arg7: memref<8x16x128xbf16, #tpu.memory_space<vmem>>, %arg8: memref<16x128xf32, #tpu.memory_space<vmem>>, %arg9: memref<8x16x384xf32, #tpu.memory_space<vmem>>) attributes {dimension_semantics = [#tpu.dimension_semantics<parallel>, #tpu.dimension_semantics<arbitrary>], iteration_bounds = array<i64: 1, 1>, scalar_prefetch = 0 : i64, scratch_operands = 2 : i64, tpu.core_type = #tpu.core_type<tc>, window_params = [{transform_indices = @transform_0, window_bounds = array<i64: 8, 16, 17>}, {transform_indices = @transform_1, window_bounds = array<i64: 1, 16, 128>}, {pipeline_mode = #tpu.pipeline_mode<synchronous>, transform_indices = @transform_2, window_bounds = array<i64: 17, 384>}, {pipeline_mode = #tpu.pipeline_mode<synchronous>, transform_indices = @transform_3, window_bounds = array<i64: 128, 384>}, {pipeline_mode = #tpu.pipeline_mode<synchronous>, transform_indices = @transform_4, window_bounds = array<i64: 1, 128>}, {transform_indices = @transform_5, window_bounds = array<i64: 8, 16, 128>}]} {
    %c0_i32 = arith.constant 0 : i32
    %0 = arith.cmpi eq, %arg1, %c0_i32 : i32
    %1 = arith.extui %0 : i1 to i32
    %c0_i32_0 = arith.constant 0 : i32
    %2 = arith.cmpi ne, %1, %c0_i32_0 : i32
    scf.if %2 {
      %c0_71 = arith.constant 0 : index
      %c0_72 = arith.constant 0 : index
      %c0_73 = arith.constant 0 : index
      %284 = vector.load %arg3[%c0_71, %c0_72, %c0_73] : memref<1x16x128xf32, #tpu.memory_space<vmem>>, vector<1x16x128xf32>
      %285 = vector.shape_cast %284 : vector<1x16x128xf32> to vector<16x128xf32>
      %c0_74 = arith.constant 0 : index
      %c0_75 = arith.constant 0 : index
      %286 = vector.load %arg8[%c0_74, %c0_75] : memref<16x128xf32, #tpu.memory_space<vmem>>, vector<16x128xf32>
      tpu.vector_store %arg8[%c0_74, %c0_75], %285 {strides = array<i32>} : memref<16x128xf32, #tpu.memory_space<vmem>>, vector<16x128xf32>,
    } else {
    }
    %c0 = arith.constant 0 : index
    %c0_1 = arith.constant 0 : index
    %c0_2 = arith.constant 0 : index
    %3 = vector.load %arg2[%c0, %c0_1, %c0_2] : memref<8x16x17xbf16, #tpu.memory_space<vmem>>, vector<8x16x17xbf16>
    %4 = vector.shape_cast %3 : vector<8x16x17xbf16> to vector<128x17xbf16>
    %c0_3 = arith.constant 0 : index
    %c0_4 = arith.constant 0 : index
    %5 = vector.load %arg4[%c0_3, %c0_4] : memref<17x384xbf16, #tpu.memory_space<vmem>>, vector<17x384xbf16>
    %cst = arith.constant dense<0.000000e+00> : vector<128x384xf32>
    %6 = tpu.matmul %4, %5, %cst {dimension_numbers = #tpu.dot_dimension_numbers<[1], [0], [0], [1], [0, 0, 1, 1], [], []>} : vector<128x17xbf16>, vector<17x384xbf16>, vector<128x384xf32> -> vector<128x384xf32>
    %7 = vector.shape_cast %6 : vector<128x384xf32> to vector<8x16x384xf32>
    %c0_5 = arith.constant 0 : index
    %c0_6 = arith.constant 0 : index
    %c0_7 = arith.constant 0 : index
    %8 = vector.load %arg9[%c0_5, %c0_6, %c0_7] : memref<8x16x384xf32, #tpu.memory_space<vmem>>, vector<8x16x384xf32>
    tpu.vector_store %arg9[%c0_5, %c0_6, %c0_7], %7 {strides = array<i32>} : memref<8x16x384xf32, #tpu.memory_space<vmem>>, vector<8x16x384xf32>,
    %c0_8 = arith.constant 0 : index
    %c0_9 = arith.constant 0 : index
    %9 = vector.load %arg5[%c0_8, %c0_9] : memref<128x384xbf16, #tpu.memory_space<vmem>>, vector<128x384xbf16>
    %c0_10 = arith.constant 0 : index
    %c0_11 = arith.constant 0 : index
    %10 = vector.load %arg8[%c0_10, %c0_11] : memref<16x128xf32, #tpu.memory_space<vmem>>, vector<16x128xf32>
    %c0_i32_12 = arith.constant 0 : i32
    %11 = arith.index_cast %c0_i32_12 : i32 to index
    %c0_13 = arith.constant 0 : index
    %c0_14 = arith.constant 0 : index
    %12 = vector.load %arg9[%11, %c0_13, %c0_14] : memref<8x16x384xf32, #tpu.memory_space<vmem>>, vector<1x16x384xf32>
    %13 = vector.shape_cast %12 : vector<1x16x384xf32> to vector<16x384xf32>
    %14 = arith.truncf %10 : vector<16x128xf32> to vector<16x128xbf16>
    %cst_15 = arith.constant dense<0.000000e+00> : vector<16x384xf32>
    %15 = tpu.matmul %14, %9, %cst_15 {dimension_numbers = #tpu.dot_dimension_numbers<[1], [0], [0], [1], [0, 0, 1, 1], [], []>} : vector<16x128xbf16>, vector<128x384xbf16>, vector<16x384xf32> -> vector<16x384xf32>
    %16 = vector.extract_strided_slice %13 {offsets = [0, 0], sizes = [16, 128], strides = [1, 1]} : vector<16x384xf32> to vector<16x128xf32>
    %17 = vector.extract_strided_slice %15 {offsets = [0, 0], sizes = [16, 128], strides = [1, 1]} : vector<16x384xf32> to vector<16x128xf32>
    %18 = arith.addf %16, %17 : vector<16x128xf32>
    %19 = arith.negf %18 : vector<16x128xf32>
    %20 = math.exp %19 : vector<16x128xf32>
    %cst_16 = arith.constant 1.000000e+00 : f32
    %21 = vector.broadcast %cst_16 : f32 to vector<16x128xf32>
    %22 = arith.addf %21, %20 : vector<16x128xf32>
    %23 = arith.divf %21, %22 : vector<16x128xf32>
    %24 = vector.extract_strided_slice %13 {offsets = [0, 128], sizes = [16, 128], strides = [1, 1]} : vector<16x384xf32> to vector<16x128xf32>
    %25 = vector.extract_strided_slice %15 {offsets = [0, 128], sizes = [16, 128], strides = [1, 1]} : vector<16x384xf32> to vector<16x128xf32>
    %26 = arith.addf %24, %25 : vector<16x128xf32>
    %27 = arith.negf %26 : vector<16x128xf32>
    %28 = math.exp %27 : vector<16x128xf32>
    %cst_17 = arith.constant 1.000000e+00 : f32
    %29 = vector.broadcast %cst_17 : f32 to vector<16x128xf32>
    %30 = arith.addf %29, %28 : vector<16x128xf32>
    %31 = arith.divf %29, %30 : vector<16x128xf32>
    %32 = vector.extract_strided_slice %15 {offsets = [0, 256], sizes = [16, 128], strides = [1, 1]} : vector<16x384xf32> to vector<16x128xf32>
    %33 = vector.extract_strided_slice %13 {offsets = [0, 256], sizes = [16, 128], strides = [1, 1]} : vector<16x384xf32> to vector<16x128xf32>
    %34 = arith.mulf %23, %32 : vector<16x128xf32>
    %35 = arith.addf %33, %34 : vector<16x128xf32>
    %36 = math.tanh %35 : vector<16x128xf32>
    %37 = arith.subf %10, %36 : vector<16x128xf32>
    %38 = arith.mulf %31, %37 : vector<16x128xf32>
    %39 = arith.addf %36, %38 : vector<16x128xf32>
    %40 = arith.truncf %39 : vector<16x128xf32> to vector<16x128xbf16>
    %41 = arith.index_cast %c0_i32_12 : i32 to index
    %c0_18 = arith.constant 0 : index
    %c0_19 = arith.constant 0 : index
    %42 = vector.load %arg7[%41, %c0_18, %c0_19] : memref<8x16x128xbf16, #tpu.memory_space<vmem>>, vector<1x16x128xbf16>
    %43 = vector.shape_cast %42 : vector<1x16x128xbf16> to vector<16x128xbf16>
    %44 = vector.shape_cast %40 : vector<16x128xbf16> to vector<1x16x128xbf16>
    tpu.vector_store %arg7[%41, %c0_18, %c0_19], %44 {strides = array<i32>} : memref<8x16x128xbf16, #tpu.memory_space<vmem>>, vector<1x16x128xbf16>,
    %c1_i32 = arith.constant 1 : i32
    %45 = arith.index_cast %c1_i32 : i32 to index
    %c0_20 = arith.constant 0 : index
    %c0_21 = arith.constant 0 : index
    %46 = vector.load %arg9[%45, %c0_20, %c0_21] : memref<8x16x384xf32, #tpu.memory_space<vmem>>, vector<1x16x384xf32>
    %47 = vector.shape_cast %46 : vector<1x16x384xf32> to vector<16x384xf32>
    %48 = arith.truncf %39 : vector<16x128xf32> to vector<16x128xbf16>
    %cst_22 = arith.constant dense<0.000000e+00> : vector<16x384xf32>
    %49 = tpu.matmul %48, %9, %cst_22 {dimension_numbers = #tpu.dot_dimension_numbers<[1], [0], [0], [1], [0, 0, 1, 1], [], []>} : vector<16x128xbf16>, vector<128x384xbf16>, vector<16x384xf32> -> vector<16x384xf32>
    %50 = vector.extract_strided_slice %47 {offsets = [0, 0], sizes = [16, 128], strides = [1, 1]} : vector<16x384xf32> to vector<16x128xf32>
    %51 = vector.extract_strided_slice %49 {offsets = [0, 0], sizes = [16, 128], strides = [1, 1]} : vector<16x384xf32> to vector<16x128xf32>
    %52 = arith.addf %50, %51 : vector<16x128xf32>
    %53 = arith.negf %52 : vector<16x128xf32>
    %54 = math.exp %53 : vector<16x128xf32>
    %cst_23 = arith.constant 1.000000e+00 : f32
    %55 = vector.broadcast %cst_23 : f32 to vector<16x128xf32>
    %56 = arith.addf %55, %54 : vector<16x128xf32>
    %57 = arith.divf %55, %56 : vector<16x128xf32>
    %58 = vector.extract_strided_slice %47 {offsets = [0, 128], sizes = [16, 128], strides = [1, 1]} : vector<16x384xf32> to vector<16x128xf32>
    %59 = vector.extract_strided_slice %49 {offsets = [0, 128], sizes = [16, 128], strides = [1, 1]} : vector<16x384xf32> to vector<16x128xf32>
    %60 = arith.addf %58, %59 : vector<16x128xf32>
    %61 = arith.negf %60 : vector<16x128xf32>
    %62 = math.exp %61 : vector<16x128xf32>
    %cst_24 = arith.constant 1.000000e+00 : f32
    %63 = vector.broadcast %cst_24 : f32 to vector<16x128xf32>
    %64 = arith.addf %63, %62 : vector<16x128xf32>
    %65 = arith.divf %63, %64 : vector<16x128xf32>
    %66 = vector.extract_strided_slice %49 {offsets = [0, 256], sizes = [16, 128], strides = [1, 1]} : vector<16x384xf32> to vector<16x128xf32>
    %67 = vector.extract_strided_slice %47 {offsets = [0, 256], sizes = [16, 128], strides = [1, 1]} : vector<16x384xf32> to vector<16x128xf32>
    %68 = arith.mulf %57, %66 : vector<16x128xf32>
    %69 = arith.addf %67, %68 : vector<16x128xf32>
    %70 = math.tanh %69 : vector<16x128xf32>
    %71 = arith.subf %39, %70 : vector<16x128xf32>
    %72 = arith.mulf %65, %71 : vector<16x128xf32>
    %73 = arith.addf %70, %72 : vector<16x128xf32>
    %74 = arith.truncf %73 : vector<16x128xf32> to vector<16x128xbf16>
    %75 = arith.index_cast %c1_i32 : i32 to index
    %c0_25 = arith.constant 0 : index
    %c0_26 = arith.constant 0 : index
    %76 = vector.load %arg7[%75, %c0_25, %c0_26] : memref<8x16x128xbf16, #tpu.memory_space<vmem>>, vector<1x16x128xbf16>
    %77 = vector.shape_cast %76 : vector<1x16x128xbf16> to vector<16x128xbf16>
    %78 = vector.shape_cast %74 : vector<16x128xbf16> to vector<1x16x128xbf16>
    tpu.vector_store %arg7[%75, %c0_25, %c0_26], %78 {strides = array<i32>} : memref<8x16x128xbf16, #tpu.memory_space<vmem>>, vector<1x16x128xbf16>,
    %c2_i32 = arith.constant 2 : i32
    %79 = arith.index_cast %c2_i32 : i32 to index
    %c0_27 = arith.constant 0 : index
    %c0_28 = arith.constant 0 : index
    %80 = vector.load %arg9[%79, %c0_27, %c0_28] : memref<8x16x384xf32, #tpu.memory_space<vmem>>, vector<1x16x384xf32>
    %81 = vector.shape_cast %80 : vector<1x16x384xf32> to vector<16x384xf32>
    %82 = arith.truncf %73 : vector<16x128xf32> to vector<16x128xbf16>
    %cst_29 = arith.constant dense<0.000000e+00> : vector<16x384xf32>
    %83 = tpu.matmul %82, %9, %cst_29 {dimension_numbers = #tpu.dot_dimension_numbers<[1], [0], [0], [1], [0, 0, 1, 1], [], []>} : vector<16x128xbf16>, vector<128x384xbf16>, vector<16x384xf32> -> vector<16x384xf32>
    %84 = vector.extract_strided_slice %81 {offsets = [0, 0], sizes = [16, 128], strides = [1, 1]} : vector<16x384xf32> to vector<16x128xf32>
    %85 = vector.extract_strided_slice %83 {offsets = [0, 0], sizes = [16, 128], strides = [1, 1]} : vector<16x384xf32> to vector<16x128xf32>
    %86 = arith.addf %84, %85 : vector<16x128xf32>
    %87 = arith.negf %86 : vector<16x128xf32>
    %88 = math.exp %87 : vector<16x128xf32>
    %cst_30 = arith.constant 1.000000e+00 : f32
    %89 = vector.broadcast %cst_30 : f32 to vector<16x128xf32>
    %90 = arith.addf %89, %88 : vector<16x128xf32>
    %91 = arith.divf %89, %90 : vector<16x128xf32>
    %92 = vector.extract_strided_slice %81 {offsets = [0, 128], sizes = [16, 128], strides = [1, 1]} : vector<16x384xf32> to vector<16x128xf32>
    %93 = vector.extract_strided_slice %83 {offsets = [0, 128], sizes = [16, 128], strides = [1, 1]} : vector<16x384xf32> to vector<16x128xf32>
    %94 = arith.addf %92, %93 : vector<16x128xf32>
    %95 = arith.negf %94 : vector<16x128xf32>
    %96 = math.exp %95 : vector<16x128xf32>
    %cst_31 = arith.constant 1.000000e+00 : f32
    %97 = vector.broadcast %cst_31 : f32 to vector<16x128xf32>
    %98 = arith.addf %97, %96 : vector<16x128xf32>
    %99 = arith.divf %97, %98 : vector<16x128xf32>
    %100 = vector.extract_strided_slice %83 {offsets = [0, 256], sizes = [16, 128], strides = [1, 1]} : vector<16x384xf32> to vector<16x128xf32>
    %101 = vector.extract_strided_slice %81 {offsets = [0, 256], sizes = [16, 128], strides = [1, 1]} : vector<16x384xf32> to vector<16x128xf32>
    %102 = arith.mulf %91, %100 : vector<16x128xf32>
    %103 = arith.addf %101, %102 : vector<16x128xf32>
    %104 = math.tanh %103 : vector<16x128xf32>
    %105 = arith.subf %73, %104 : vector<16x128xf32>
    %106 = arith.mulf %99, %105 : vector<16x128xf32>
    %107 = arith.addf %104, %106 : vector<16x128xf32>
    %108 = arith.truncf %107 : vector<16x128xf32> to vector<16x128xbf16>
    %109 = arith.index_cast %c2_i32 : i32 to index
    %c0_32 = arith.constant 0 : index
    %c0_33 = arith.constant 0 : index
    %110 = vector.load %arg7[%109, %c0_32, %c0_33] : memref<8x16x128xbf16, #tpu.memory_space<vmem>>, vector<1x16x128xbf16>
    %111 = vector.shape_cast %110 : vector<1x16x128xbf16> to vector<16x128xbf16>
    %112 = vector.shape_cast %108 : vector<16x128xbf16> to vector<1x16x128xbf16>
    tpu.vector_store %arg7[%109, %c0_32, %c0_33], %112 {strides = array<i32>} : memref<8x16x128xbf16, #tpu.memory_space<vmem>>, vector<1x16x128xbf16>,
    %c3_i32 = arith.constant 3 : i32
    %113 = arith.index_cast %c3_i32 : i32 to index
    %c0_34 = arith.constant 0 : index
    %c0_35 = arith.constant 0 : index
    %114 = vector.load %arg9[%113, %c0_34, %c0_35] : memref<8x16x384xf32, #tpu.memory_space<vmem>>, vector<1x16x384xf32>
    %115 = vector.shape_cast %114 : vector<1x16x384xf32> to vector<16x384xf32>
    %116 = arith.truncf %107 : vector<16x128xf32> to vector<16x128xbf16>
    %cst_36 = arith.constant dense<0.000000e+00> : vector<16x384xf32>
    %117 = tpu.matmul %116, %9, %cst_36 {dimension_numbers = #tpu.dot_dimension_numbers<[1], [0], [0], [1], [0, 0, 1, 1], [], []>} : vector<16x128xbf16>, vector<128x384xbf16>, vector<16x384xf32> -> vector<16x384xf32>
    %118 = vector.extract_strided_slice %115 {offsets = [0, 0], sizes = [16, 128], strides = [1, 1]} : vector<16x384xf32> to vector<16x128xf32>
    %119 = vector.extract_strided_slice %117 {offsets = [0, 0], sizes = [16, 128], strides = [1, 1]} : vector<16x384xf32> to vector<16x128xf32>
    %120 = arith.addf %118, %119 : vector<16x128xf32>
    %121 = arith.negf %120 : vector<16x128xf32>
    %122 = math.exp %121 : vector<16x128xf32>
    %cst_37 = arith.constant 1.000000e+00 : f32
    %123 = vector.broadcast %cst_37 : f32 to vector<16x128xf32>
    %124 = arith.addf %123, %122 : vector<16x128xf32>
    %125 = arith.divf %123, %124 : vector<16x128xf32>
    %126 = vector.extract_strided_slice %115 {offsets = [0, 128], sizes = [16, 128], strides = [1, 1]} : vector<16x384xf32> to vector<16x128xf32>
    %127 = vector.extract_strided_slice %117 {offsets = [0, 128], sizes = [16, 128], strides = [1, 1]} : vector<16x384xf32> to vector<16x128xf32>
    %128 = arith.addf %126, %127 : vector<16x128xf32>
    %129 = arith.negf %128 : vector<16x128xf32>
    %130 = math.exp %129 : vector<16x128xf32>
    %cst_38 = arith.constant 1.000000e+00 : f32
    %131 = vector.broadcast %cst_38 : f32 to vector<16x128xf32>
    %132 = arith.addf %131, %130 : vector<16x128xf32>
    %133 = arith.divf %131, %132 : vector<16x128xf32>
    %134 = vector.extract_strided_slice %117 {offsets = [0, 256], sizes = [16, 128], strides = [1, 1]} : vector<16x384xf32> to vector<16x128xf32>
    %135 = vector.extract_strided_slice %115 {offsets = [0, 256], sizes = [16, 128], strides = [1, 1]} : vector<16x384xf32> to vector<16x128xf32>
    %136 = arith.mulf %125, %134 : vector<16x128xf32>
    %137 = arith.addf %135, %136 : vector<16x128xf32>
    %138 = math.tanh %137 : vector<16x128xf32>
    %139 = arith.subf %107, %138 : vector<16x128xf32>
    %140 = arith.mulf %133, %139 : vector<16x128xf32>
    %141 = arith.addf %138, %140 : vector<16x128xf32>
    %142 = arith.truncf %141 : vector<16x128xf32> to vector<16x128xbf16>
    %143 = arith.index_cast %c3_i32 : i32 to index
    %c0_39 = arith.constant 0 : index
    %c0_40 = arith.constant 0 : index
    %144 = vector.load %arg7[%143, %c0_39, %c0_40] : memref<8x16x128xbf16, #tpu.memory_space<vmem>>, vector<1x16x128xbf16>
    %145 = vector.shape_cast %144 : vector<1x16x128xbf16> to vector<16x128xbf16>
    %146 = vector.shape_cast %142 : vector<16x128xbf16> to vector<1x16x128xbf16>
    tpu.vector_store %arg7[%143, %c0_39, %c0_40], %146 {strides = array<i32>} : memref<8x16x128xbf16, #tpu.memory_space<vmem>>, vector<1x16x128xbf16>,
    %c4_i32 = arith.constant 4 : i32
    %147 = arith.index_cast %c4_i32 : i32 to index
    %c0_41 = arith.constant 0 : index
    %c0_42 = arith.constant 0 : index
    %148 = vector.load %arg9[%147, %c0_41, %c0_42] : memref<8x16x384xf32, #tpu.memory_space<vmem>>, vector<1x16x384xf32>
    %149 = vector.shape_cast %148 : vector<1x16x384xf32> to vector<16x384xf32>
    %150 = arith.truncf %141 : vector<16x128xf32> to vector<16x128xbf16>
    %cst_43 = arith.constant dense<0.000000e+00> : vector<16x384xf32>
    %151 = tpu.matmul %150, %9, %cst_43 {dimension_numbers = #tpu.dot_dimension_numbers<[1], [0], [0], [1], [0, 0, 1, 1], [], []>} : vector<16x128xbf16>, vector<128x384xbf16>, vector<16x384xf32> -> vector<16x384xf32>
    %152 = vector.extract_strided_slice %149 {offsets = [0, 0], sizes = [16, 128], strides = [1, 1]} : vector<16x384xf32> to vector<16x128xf32>
    %153 = vector.extract_strided_slice %151 {offsets = [0, 0], sizes = [16, 128], strides = [1, 1]} : vector<16x384xf32> to vector<16x128xf32>
    %154 = arith.addf %152, %153 : vector<16x128xf32>
    %155 = arith.negf %154 : vector<16x128xf32>
    %156 = math.exp %155 : vector<16x128xf32>
    %cst_44 = arith.constant 1.000000e+00 : f32
    %157 = vector.broadcast %cst_44 : f32 to vector<16x128xf32>
    %158 = arith.addf %157, %156 : vector<16x128xf32>
    %159 = arith.divf %157, %158 : vector<16x128xf32>
    %160 = vector.extract_strided_slice %149 {offsets = [0, 128], sizes = [16, 128], strides = [1, 1]} : vector<16x384xf32> to vector<16x128xf32>
    %161 = vector.extract_strided_slice %151 {offsets = [0, 128], sizes = [16, 128], strides = [1, 1]} : vector<16x384xf32> to vector<16x128xf32>
    %162 = arith.addf %160, %161 : vector<16x128xf32>
    %163 = arith.negf %162 : vector<16x128xf32>
    %164 = math.exp %163 : vector<16x128xf32>
    %cst_45 = arith.constant 1.000000e+00 : f32
    %165 = vector.broadcast %cst_45 : f32 to vector<16x128xf32>
    %166 = arith.addf %165, %164 : vector<16x128xf32>
    %167 = arith.divf %165, %166 : vector<16x128xf32>
    %168 = vector.extract_strided_slice %151 {offsets = [0, 256], sizes = [16, 128], strides = [1, 1]} : vector<16x384xf32> to vector<16x128xf32>
    %169 = vector.extract_strided_slice %149 {offsets = [0, 256], sizes = [16, 128], strides = [1, 1]} : vector<16x384xf32> to vector<16x128xf32>
    %170 = arith.mulf %159, %168 : vector<16x128xf32>
    %171 = arith.addf %169, %170 : vector<16x128xf32>
    %172 = math.tanh %171 : vector<16x128xf32>
    %173 = arith.subf %141, %172 : vector<16x128xf32>
    %174 = arith.mulf %167, %173 : vector<16x128xf32>
    %175 = arith.addf %172, %174 : vector<16x128xf32>
    %176 = arith.truncf %175 : vector<16x128xf32> to vector<16x128xbf16>
    %177 = arith.index_cast %c4_i32 : i32 to index
    %c0_46 = arith.constant 0 : index
    %c0_47 = arith.constant 0 : index
    %178 = vector.load %arg7[%177, %c0_46, %c0_47] : memref<8x16x128xbf16, #tpu.memory_space<vmem>>, vector<1x16x128xbf16>
    %179 = vector.shape_cast %178 : vector<1x16x128xbf16> to vector<16x128xbf16>
    %180 = vector.shape_cast %176 : vector<16x128xbf16> to vector<1x16x128xbf16>
    tpu.vector_store %arg7[%177, %c0_46, %c0_47], %180 {strides = array<i32>} : memref<8x16x128xbf16, #tpu.memory_space<vmem>>, vector<1x16x128xbf16>,
    %c5_i32 = arith.constant 5 : i32
    %181 = arith.index_cast %c5_i32 : i32 to index
    %c0_48 = arith.constant 0 : index
    %c0_49 = arith.constant 0 : index
    %182 = vector.load %arg9[%181, %c0_48, %c0_49] : memref<8x16x384xf32, #tpu.memory_space<vmem>>, vector<1x16x384xf32>
    %183 = vector.shape_cast %182 : vector<1x16x384xf32> to vector<16x384xf32>
    %184 = arith.truncf %175 : vector<16x128xf32> to vector<16x128xbf16>
    %cst_50 = arith.constant dense<0.000000e+00> : vector<16x384xf32>
    %185 = tpu.matmul %184, %9, %cst_50 {dimension_numbers = #tpu.dot_dimension_numbers<[1], [0], [0], [1], [0, 0, 1, 1], [], []>} : vector<16x128xbf16>, vector<128x384xbf16>, vector<16x384xf32> -> vector<16x384xf32>
    %186 = vector.extract_strided_slice %183 {offsets = [0, 0], sizes = [16, 128], strides = [1, 1]} : vector<16x384xf32> to vector<16x128xf32>
    %187 = vector.extract_strided_slice %185 {offsets = [0, 0], sizes = [16, 128], strides = [1, 1]} : vector<16x384xf32> to vector<16x128xf32>
    %188 = arith.addf %186, %187 : vector<16x128xf32>
    %189 = arith.negf %188 : vector<16x128xf32>
    %190 = math.exp %189 : vector<16x128xf32>
    %cst_51 = arith.constant 1.000000e+00 : f32
    %191 = vector.broadcast %cst_51 : f32 to vector<16x128xf32>
    %192 = arith.addf %191, %190 : vector<16x128xf32>
    %193 = arith.divf %191, %192 : vector<16x128xf32>
    %194 = vector.extract_strided_slice %183 {offsets = [0, 128], sizes = [16, 128], strides = [1, 1]} : vector<16x384xf32> to vector<16x128xf32>
    %195 = vector.extract_strided_slice %185 {offsets = [0, 128], sizes = [16, 128], strides = [1, 1]} : vector<16x384xf32> to vector<16x128xf32>
    %196 = arith.addf %194, %195 : vector<16x128xf32>
    %197 = arith.negf %196 : vector<16x128xf32>
    %198 = math.exp %197 : vector<16x128xf32>
    %cst_52 = arith.constant 1.000000e+00 : f32
    %199 = vector.broadcast %cst_52 : f32 to vector<16x128xf32>
    %200 = arith.addf %199, %198 : vector<16x128xf32>
    %201 = arith.divf %199, %200 : vector<16x128xf32>
    %202 = vector.extract_strided_slice %185 {offsets = [0, 256], sizes = [16, 128], strides = [1, 1]} : vector<16x384xf32> to vector<16x128xf32>
    %203 = vector.extract_strided_slice %183 {offsets = [0, 256], sizes = [16, 128], strides = [1, 1]} : vector<16x384xf32> to vector<16x128xf32>
    %204 = arith.mulf %193, %202 : vector<16x128xf32>
    %205 = arith.addf %203, %204 : vector<16x128xf32>
    %206 = math.tanh %205 : vector<16x128xf32>
    %207 = arith.subf %175, %206 : vector<16x128xf32>
    %208 = arith.mulf %201, %207 : vector<16x128xf32>
    %209 = arith.addf %206, %208 : vector<16x128xf32>
    %210 = arith.truncf %209 : vector<16x128xf32> to vector<16x128xbf16>
    %211 = arith.index_cast %c5_i32 : i32 to index
    %c0_53 = arith.constant 0 : index
    %c0_54 = arith.constant 0 : index
    %212 = vector.load %arg7[%211, %c0_53, %c0_54] : memref<8x16x128xbf16, #tpu.memory_space<vmem>>, vector<1x16x128xbf16>
    %213 = vector.shape_cast %212 : vector<1x16x128xbf16> to vector<16x128xbf16>
    %214 = vector.shape_cast %210 : vector<16x128xbf16> to vector<1x16x128xbf16>
    tpu.vector_store %arg7[%211, %c0_53, %c0_54], %214 {strides = array<i32>} : memref<8x16x128xbf16, #tpu.memory_space<vmem>>, vector<1x16x128xbf16>,
    %c6_i32 = arith.constant 6 : i32
    %215 = arith.index_cast %c6_i32 : i32 to index
    %c0_55 = arith.constant 0 : index
    %c0_56 = arith.constant 0 : index
    %216 = vector.load %arg9[%215, %c0_55, %c0_56] : memref<8x16x384xf32, #tpu.memory_space<vmem>>, vector<1x16x384xf32>
    %217 = vector.shape_cast %216 : vector<1x16x384xf32> to vector<16x384xf32>
    %218 = arith.truncf %209 : vector<16x128xf32> to vector<16x128xbf16>
    %cst_57 = arith.constant dense<0.000000e+00> : vector<16x384xf32>
    %219 = tpu.matmul %218, %9, %cst_57 {dimension_numbers = #tpu.dot_dimension_numbers<[1], [0], [0], [1], [0, 0, 1, 1], [], []>} : vector<16x128xbf16>, vector<128x384xbf16>, vector<16x384xf32> -> vector<16x384xf32>
    %220 = vector.extract_strided_slice %217 {offsets = [0, 0], sizes = [16, 128], strides = [1, 1]} : vector<16x384xf32> to vector<16x128xf32>
    %221 = vector.extract_strided_slice %219 {offsets = [0, 0], sizes = [16, 128], strides = [1, 1]} : vector<16x384xf32> to vector<16x128xf32>
    %222 = arith.addf %220, %221 : vector<16x128xf32>
    %223 = arith.negf %222 : vector<16x128xf32>
    %224 = math.exp %223 : vector<16x128xf32>
    %cst_58 = arith.constant 1.000000e+00 : f32
    %225 = vector.broadcast %cst_58 : f32 to vector<16x128xf32>
    %226 = arith.addf %225, %224 : vector<16x128xf32>
    %227 = arith.divf %225, %226 : vector<16x128xf32>
    %228 = vector.extract_strided_slice %217 {offsets = [0, 128], sizes = [16, 128], strides = [1, 1]} : vector<16x384xf32> to vector<16x128xf32>
    %229 = vector.extract_strided_slice %219 {offsets = [0, 128], sizes = [16, 128], strides = [1, 1]} : vector<16x384xf32> to vector<16x128xf32>
    %230 = arith.addf %228, %229 : vector<16x128xf32>
    %231 = arith.negf %230 : vector<16x128xf32>
    %232 = math.exp %231 : vector<16x128xf32>
    %cst_59 = arith.constant 1.000000e+00 : f32
    %233 = vector.broadcast %cst_59 : f32 to vector<16x128xf32>
    %234 = arith.addf %233, %232 : vector<16x128xf32>
    %235 = arith.divf %233, %234 : vector<16x128xf32>
    %236 = vector.extract_strided_slice %219 {offsets = [0, 256], sizes = [16, 128], strides = [1, 1]} : vector<16x384xf32> to vector<16x128xf32>
    %237 = vector.extract_strided_slice %217 {offsets = [0, 256], sizes = [16, 128], strides = [1, 1]} : vector<16x384xf32> to vector<16x128xf32>
    %238 = arith.mulf %227, %236 : vector<16x128xf32>
    %239 = arith.addf %237, %238 : vector<16x128xf32>
    %240 = math.tanh %239 : vector<16x128xf32>
    %241 = arith.subf %209, %240 : vector<16x128xf32>
    %242 = arith.mulf %235, %241 : vector<16x128xf32>
    %243 = arith.addf %240, %242 : vector<16x128xf32>
    %244 = arith.truncf %243 : vector<16x128xf32> to vector<16x128xbf16>
    %245 = arith.index_cast %c6_i32 : i32 to index
    %c0_60 = arith.constant 0 : index
    %c0_61 = arith.constant 0 : index
    %246 = vector.load %arg7[%245, %c0_60, %c0_61] : memref<8x16x128xbf16, #tpu.memory_space<vmem>>, vector<1x16x128xbf16>
    %247 = vector.shape_cast %246 : vector<1x16x128xbf16> to vector<16x128xbf16>
    %248 = vector.shape_cast %244 : vector<16x128xbf16> to vector<1x16x128xbf16>
    tpu.vector_store %arg7[%245, %c0_60, %c0_61], %248 {strides = array<i32>} : memref<8x16x128xbf16, #tpu.memory_space<vmem>>, vector<1x16x128xbf16>,
    %c7_i32 = arith.constant 7 : i32
    %249 = arith.index_cast %c7_i32 : i32 to index
    %c0_62 = arith.constant 0 : index
    %c0_63 = arith.constant 0 : index
    %250 = vector.load %arg9[%249, %c0_62, %c0_63] : memref<8x16x384xf32, #tpu.memory_space<vmem>>, vector<1x16x384xf32>
    %251 = vector.shape_cast %250 : vector<1x16x384xf32> to vector<16x384xf32>
    %252 = arith.truncf %243 : vector<16x128xf32> to vector<16x128xbf16>
    %cst_64 = arith.constant dense<0.000000e+00> : vector<16x384xf32>
    %253 = tpu.matmul %252, %9, %cst_64 {dimension_numbers = #tpu.dot_dimension_numbers<[1], [0], [0], [1], [0, 0, 1, 1], [], []>} : vector<16x128xbf16>, vector<128x384xbf16>, vector<16x384xf32> -> vector<16x384xf32>
    %254 = vector.extract_strided_slice %251 {offsets = [0, 0], sizes = [16, 128], strides = [1, 1]} : vector<16x384xf32> to vector<16x128xf32>
    %255 = vector.extract_strided_slice %253 {offsets = [0, 0], sizes = [16, 128], strides = [1, 1]} : vector<16x384xf32> to vector<16x128xf32>
    %256 = arith.addf %254, %255 : vector<16x128xf32>
    %257 = arith.negf %256 : vector<16x128xf32>
    %258 = math.exp %257 : vector<16x128xf32>
    %cst_65 = arith.constant 1.000000e+00 : f32
    %259 = vector.broadcast %cst_65 : f32 to vector<16x128xf32>
    %260 = arith.addf %259, %258 : vector<16x128xf32>
    %261 = arith.divf %259, %260 : vector<16x128xf32>
    %262 = vector.extract_strided_slice %251 {offsets = [0, 128], sizes = [16, 128], strides = [1, 1]} : vector<16x384xf32> to vector<16x128xf32>
    %263 = vector.extract_strided_slice %253 {offsets = [0, 128], sizes = [16, 128], strides = [1, 1]} : vector<16x384xf32> to vector<16x128xf32>
    %264 = arith.addf %262, %263 : vector<16x128xf32>
    %265 = arith.negf %264 : vector<16x128xf32>
    %266 = math.exp %265 : vector<16x128xf32>
    %cst_66 = arith.constant 1.000000e+00 : f32
    %267 = vector.broadcast %cst_66 : f32 to vector<16x128xf32>
    %268 = arith.addf %267, %266 : vector<16x128xf32>
    %269 = arith.divf %267, %268 : vector<16x128xf32>
    %270 = vector.extract_strided_slice %253 {offsets = [0, 256], sizes = [16, 128], strides = [1, 1]} : vector<16x384xf32> to vector<16x128xf32>
    %271 = vector.extract_strided_slice %251 {offsets = [0, 256], sizes = [16, 128], strides = [1, 1]} : vector<16x384xf32> to vector<16x128xf32>
    %272 = arith.mulf %261, %270 : vector<16x128xf32>
    %273 = arith.addf %271, %272 : vector<16x128xf32>
    %274 = math.tanh %273 : vector<16x128xf32>
    %275 = arith.subf %243, %274 : vector<16x128xf32>
    %276 = arith.mulf %269, %275 : vector<16x128xf32>
    %277 = arith.addf %274, %276 : vector<16x128xf32>
    %278 = arith.truncf %277 : vector<16x128xf32> to vector<16x128xbf16>
    %279 = arith.index_cast %c7_i32 : i32 to index
    %c0_67 = arith.constant 0 : index
    %c0_68 = arith.constant 0 : index
    %280 = vector.load %arg7[%279, %c0_67, %c0_68] : memref<8x16x128xbf16, #tpu.memory_space<vmem>>, vector<1x16x128xbf16>
    %281 = vector.shape_cast %280 : vector<1x16x128xbf16> to vector<16x128xbf16>
    %282 = vector.shape_cast %278 : vector<16x128xbf16> to vector<1x16x128xbf16>
    tpu.vector_store %arg7[%279, %c0_67, %c0_68], %282 {strides = array<i32>} : memref<8x16x128xbf16, #tpu.memory_space<vmem>>, vector<1x16x128xbf16>,
    %c8_i32 = arith.constant 8 : i32
    %c0_69 = arith.constant 0 : index
    %c0_70 = arith.constant 0 : index
    %283 = vector.load %arg8[%c0_69, %c0_70] : memref<16x128xf32, #tpu.memory_space<vmem>>, vector<16x128xf32>
    tpu.vector_store %arg8[%c0_69, %c0_70], %277 {strides = array<i32>} : memref<16x128xf32, #tpu.memory_space<vmem>>, vector<16x128xf32>,
    return
  }
  func.func @transform_0(%arg0: i32, %arg1: i32) -> (i32, i32, i32) {
    %c0_i32 = arith.constant 0 : i32
    %c0_i32_0 = arith.constant 0 : i32
    return %arg1, %arg0, %c0_i32 : i32, i32, i32
  }
  func.func @transform_1(%arg0: i32, %arg1: i32) -> (i32, i32, i32) {
    %c0_i32 = arith.constant 0 : i32
    %c0_i32_0 = arith.constant 0 : i32
    %c0_i32_1 = arith.constant 0 : i32
    return %c0_i32, %arg0, %c0_i32_0 : i32, i32, i32
  }
  func.func @transform_2(%arg0: i32, %arg1: i32) -> (i32, i32) {
    %c0_i32 = arith.constant 0 : i32
    %c0_i32_0 = arith.constant 0 : i32
    %c0_i32_1 = arith.constant 0 : i32
    return %c0_i32, %c0_i32_0 : i32, i32
  }
  func.func @transform_3(%arg0: i32, %arg1: i32) -> (i32, i32) {
    %c0_i32 = arith.constant 0 : i32
    %c0_i32_0 = arith.constant 0 : i32
    %c0_i32_1 = arith.constant 0 : i32
    return %c0_i32, %c0_i32_0 : i32, i32
  }
  func.func @transform_4(%arg0: i32, %arg1: i32) -> (i32, i32) {
    %c0_i32 = arith.constant 0 : i32
    %c0_i32_0 = arith.constant 0 : i32
    %c0_i32_1 = arith.constant 0 : i32
    return %c0_i32, %c0_i32_0 : i32, i32
  }
  func.func @transform_5(%arg0: i32, %arg1: i32) -> (i32, i32, i32) {
    %c0_i32 = arith.constant 0 : i32
    %c0_i32_0 = arith.constant 0 : i32
    return %arg1, %arg0, %c0_i32 : i32, i32, i32
  }
}

</mosaic_0001>

<llo_original>
// kernel: tpu_custom_call.1
$region0: #{tpu_custom_call.1}
  #allocation0 [shape = 'u32[]', space=smem, size = 0x4, offset = 0x4, fixed_abs, tag = 'smem constant byte address 0x4 - core index']
  #allocation1 [shape = 'u32[144,128]{1,0:T(1,128)}', space=vmem, size = 0x12000, scoped, tag = 'internal scratch']
  #allocation2 [shape = 'f32[16,128]{1,0:T(8,128)}', space=vmem, size = 0x2000, scoped, tag = 'scratch operand']
  #allocation3 [shape = 'f32[8,16,384]{2,1,0:T(8,128)}', space=vmem, size = 0x30000, scoped, tag = 'scratch operand']
  %s0 = inlined_call_operand.hbm [shape: bf16[8,16,17], index: 0, kind: input, shape index: {}]
  %s1 = inlined_call_operand.hbm [shape: f32[1,16,128], index: 1, kind: input, shape index: {}]
  %s2 = inlined_call_operand.hbm [shape: bf16[17,384], index: 2, kind: input, shape index: {}]
  %s3 = inlined_call_operand.hbm [shape: bf16[128,384], index: 3, kind: input, shape index: {}]
  %s4 = inlined_call_operand.vmem [shape: f32[1,128], index: 4, kind: input, shape index: {}]
  %s5 = inlined_call_operand.hbm [shape: bf16[8,16,128], index: 5, kind: output, shape index: {}]
  %s6 = sld [smem:[#allocation0]]
  $region50: #{tpu_custom_call.1} parent=0
    _
  %s8 = ssub.s32 1, %s6
  %s9 = scalar_select 0, %s8, %s6
  $region1: #{tpu_custom_call.1} parent=0
    #allocation4 [shape = 'u8[32768]{0}', space=vmem, size = 0x8000, scoped, tag = 'input window, operand 0, single buffered']
    #allocation5 [shape = 's32[1]{0}', space=sflag, size = 0x4, scoped, tag = 'scoped memory for tpu_custom_call.1']
    #allocation6 [shape = 's32[1]{0}', space=sflag, size = 0x4, scoped, tag = 'scoped memory for tpu_custom_call.1']
    #allocation7 [shape = 'u8[8192]{0}', space=vmem, size = 0x2000, scoped, tag = 'input window, operand 1, single buffered']
    #allocation8 [shape = 's32[1]{0}', space=sflag, size = 0x4, scoped, tag = 'scoped memory for tpu_custom_call.1']
    #allocation9 [shape = 'u8[18432]{0}', space=vmem, size = 0x4800, scoped, tag = 'input window, operand 2, single buffered']
    #allocation10 [shape = 'u8[98304]{0}', space=vmem, size = 0x18000, scoped, tag = 'input window, operand 3, single buffered']
    #allocation11 [shape = 's32[1]{0}', space=sflag, size = 0x4, scoped, tag = 'scoped memory for tpu_custom_call.1']
    #allocation12 [shape = 'u8[32768]{0}', space=vmem, size = 0x8000, scoped, tag = 'output window, operand 0, single buffered']
    %10 = vsyncpa [#allocation5], 0
    %11 = vsyncpa [#allocation8], 0
    %12 = vsyncpa [#allocation11], 0
    %13 = vsyncpa [#allocation6], 0
    // Predicated region
    $region2: #{tpu_custom_call.1} parent=1 // pred_check
      _
    $region3: #{tpu_custom_call.1} parent=1 // pred_check_branch
      %15 = sbr.rel (0) target = $region5
    $region4: #{tpu_custom_call.1} parent=1 // pred_region
      %s17 = ssub.s32 1024, 1024
      %18 = vsyncadd [#allocation5], %s17
      %s19 = sshll.u32 [#allocation4], 4
      %s20 = int_to_ptr.vmem [resolvable:$true] %s19
      %25 = dma.hbm_to_vmem [thread:$0]  %s0, 1024, %s20, [#allocation5], 64, 64, 4
    $region5: #{tpu_custom_call.1} parent=1 // pred_fallthru
      _
    // Predicated region
    $region6: #{tpu_custom_call.1} parent=1 // pred_check
      _
    $region7: #{tpu_custom_call.1} parent=1 // pred_check_branch
      %27 = sbr.rel (0) target = $region9
    $region8: #{tpu_custom_call.1} parent=1 // pred_region
      %s29 = ssub.s32 256, 256
      %30 = vsyncadd [#allocation8], %s29
      %s31 = sshll.u32 [#allocation7], 4
      %s32 = int_to_ptr.vmem [resolvable:$true] %s31
      %37 = dma.hbm_to_vmem [thread:$0]  %s1, 256, %s32, [#allocation8], 128, 128, 8
    $region9: #{tpu_custom_call.1} parent=1 // pred_fallthru
      _
    // Predicated region
    $region10: #{tpu_custom_call.1} parent=1 // pred_check
      _
    $region11: #{tpu_custom_call.1} parent=1 // pred_check_branch
      %39 = sbr.rel (0) target = $region13
    $region12: #{tpu_custom_call.1} parent=1 // pred_region
      %s41 = ssub.s32 576, 576
      %42 = vsyncadd [#allocation8], %s41
      %s43 = sshll.u32 [#allocation9], 4
      %s44 = int_to_ptr.vmem [resolvable:$true] %s43
      %49 = dma.hbm_to_vmem [thread:$0]  %s2, 576, %s44, [#allocation8], 192, 192, 12
    $region13: #{tpu_custom_call.1} parent=1 // pred_fallthru
      _
    // Predicated region
    $region14: #{tpu_custom_call.1} parent=1 // pred_check
      _
    $region15: #{tpu_custom_call.1} parent=1 // pred_check_branch
      %51 = sbr.rel (0) target = $region17
    $region16: #{tpu_custom_call.1} parent=1 // pred_region
      %s53 = ssub.s32 3072, 3072
      %54 = vsyncadd [#allocation11], %s53
      %s55 = sshll.u32 [#allocation10], 4
      %s56 = int_to_ptr.vmem [resolvable:$true] %s55
      %61 = dma.hbm_to_vmem [thread:$0]  %s3, 3072, %s56, [#allocation11], 192, 192, 12
    $region17: #{tpu_custom_call.1} parent=1 // pred_fallthru
      _
    // Predicated region
    $region18: #{tpu_custom_call.1} parent=1 // pred_check
      _
    $region19: #{tpu_custom_call.1} parent=1 // pred_check_branch
      %63 = sbr.rel (0) target = $region21
    $region20: #{tpu_custom_call.1} parent=1 // pred_region
      _
    $region21: #{tpu_custom_call.1} parent=1 // pred_fallthru
      _
    // Predicated region
    $region22: #{tpu_custom_call.1} parent=1 // pred_check
      _
    $region23: #{tpu_custom_call.1} parent=1 // pred_check_branch
      %65 = sbr.rel (0) target = $region25
    $region24: #{tpu_custom_call.1} parent=1 // pred_region
      %66 = dma.done [#allocation5], 1024
    $region25: #{tpu_custom_call.1} parent=1 // pred_fallthru
      _
    // Predicated region
    $region26: #{tpu_custom_call.1} parent=1 // pred_check
      _
    $region27: #{tpu_custom_call.1} parent=1 // pred_check_branch
      %68 = sbr.rel (0) target = $region29
    $region28: #{tpu_custom_call.1} parent=1 // pred_region
      %69 = dma.done [#allocation8], 256
    $region29: #{tpu_custom_call.1} parent=1 // pred_fallthru
      _
    // Predicated region
    $region30: #{tpu_custom_call.1} parent=1 // pred_check
      _
    $region31: #{tpu_custom_call.1} parent=1 // pred_check_branch
      %71 = sbr.rel (0) target = $region33
    $region32: #{tpu_custom_call.1} parent=1 // pred_region
      %72 = dma.done [#allocation8], 576
    $region33: #{tpu_custom_call.1} parent=1 // pred_fallthru
      _
    // Predicated region
    $region34: #{tpu_custom_call.1} parent=1 // pred_check
      _
    $region35: #{tpu_custom_call.1} parent=1 // pred_check_branch
      %74 = sbr.rel (0) target = $region37
    $region36: #{tpu_custom_call.1} parent=1 // pred_region
      %75 = dma.done [#allocation11], 3072
    $region37: #{tpu_custom_call.1} parent=1 // pred_fallthru
      _
    %p77 = scmp.eq.s32.totalorder 0, 0
    // Predicated region
    $region38: #{tpu_custom_call.1} parent=1 // pred_check
      %p78 = pneg %p77
    $region39: #{tpu_custom_call.1} parent=1 // pred_check_branch
      %80 = sbr.rel (%p78) target = $region41
    $region40: #{tpu_custom_call.1} parent=1 // pred_region
      %v81 = vld [vmem:[#allocation7] sm:$0xff]
      %v82 = vld [vmem:[#allocation7 + $0x8] sm:$0xff]
      %83 = vst [vmem:[#allocation2] sm:$0xff] %v81
      %84 = vst [vmem:[#allocation2 + $0x8] sm:$0xff] %v82
    $region41: #{tpu_custom_call.1} parent=1 // pred_fallthru
      _
    %v85 = vld [vmem:[#allocation4] sm:$0xf]
    %v86 = vld [vmem:[#allocation4 + $0x4] sm:$0xf]
    %v87 = vld [vmem:[#allocation4 + $0x8] sm:$0xf]
    %v88 = vld [vmem:[#allocation4 + $0xc] sm:$0xf]
    %v89 = vld [vmem:[#allocation4 + $0x10] sm:$0xf]
    %v90 = vld [vmem:[#allocation4 + $0x14] sm:$0xf]
    %v91 = vld [vmem:[#allocation4 + $0x18] sm:$0xf]
    %v92 = vld [vmem:[#allocation4 + $0x1c] sm:$0xf]
    %v93 = vld [vmem:[#allocation4 + $0x20] sm:$0xf]
    %v94 = vld [vmem:[#allocation4 + $0x24] sm:$0xf]
    %v95 = vld [vmem:[#allocation4 + $0x28] sm:$0xf]
    %v96 = vld [vmem:[#allocation4 + $0x2c] sm:$0xf]
    %v97 = vld [vmem:[#allocation4 + $0x30] sm:$0xf]
    %v98 = vld [vmem:[#allocation4 + $0x34] sm:$0xf]
    %v99 = vld [vmem:[#allocation4 + $0x38] sm:$0xf]
    %v100 = vld [vmem:[#allocation4 + $0x3c] sm:$0xf]
    %v101 = vld [vmem:[#allocation9] sm:$0xff]
    %v102 = vld [vmem:[#allocation9 + $0x8] sm:$0xf]
    %v103 = vld [vmem:[#allocation9 + $0xc] sm:$0xff]
    %v104 = vld [vmem:[#allocation9 + $0x14] sm:$0xf]
    %v105 = vld [vmem:[#allocation9 + $0x18] sm:$0x11]
    %v106 = vld [vmem:[#allocation9 + $0x20] sm:$0x1]
    %v123 = vunpack.c.l.b16 %v85
    %v124 = vunpack.c.l.b16 %v86
    %v125 = vunpack.c.l.b16 %v87
    %v126 = vunpack.c.l.b16 %v88
    %v127 = vunpack.c.l.b16 %v89
    %v128 = vunpack.c.l.b16 %v90
    %v129 = vunpack.c.l.b16 %v91
    %v130 = vunpack.c.l.b16 %v92
    %v131 = vunpack.c.l.b16 %v93
    %v132 = vunpack.c.l.b16 %v94
    %v133 = vunpack.c.l.b16 %v95
    %v134 = vunpack.c.l.b16 %v96
    %v135 = vunpack.c.l.b16 %v97
    %v136 = vunpack.c.l.b16 %v98
    %v137 = vunpack.c.l.b16 %v99
    %v138 = vunpack.c.l.b16 %v100
    %v139 = vpack.c.b16 %v124, %v123
    %v140 = vpack.c.b16 %v126, %v125
    %v141 = vpack.c.b16 %v128, %v127
    %v142 = vpack.c.b16 %v130, %v129
    %v143 = vpack.c.b16 %v132, %v131
    %v144 = vpack.c.b16 %v134, %v133
    %v145 = vpack.c.b16 %v136, %v135
    %v146 = vpack.c.b16 %v138, %v137
    %v153 = vunpack.c.l.b16 %v101
    %v154 = vunpack.c.h.b16 %v101
    %v155 = vunpack.c.l.b16 %v102
    %v156 = vunpack.c.l.b16 %v103
    %v157 = vunpack.c.h.b16 %v103
    %v158 = vunpack.c.l.b16 %v104
    %v159 = vunpack.c.l.b16 %v105
    %v160 = vunpack.c.h.b16 %v105
    %v161 = vunpack.c.l.b16 %v106
    %v162 = vpack.c.b16 %v156, %v153
    %v163 = vpack.c.b16 %v157, %v154
    %v164 = vpack.c.b16 %v158, %v155
    %v165 = vpack.c.b16 %v159, %v159
    %v166 = vpack.c.b16 %v160, %v160
    %v167 = vpack.c.b16 %v161, %v161
    %vm171 = vcmask 138240
    %v173 = vsel %vm171, %v139, 0
    %v176 = vsel %vm171, %v140, 0
    %v179 = vsel %vm171, %v141, 0
    %v182 = vsel %vm171, %v142, 0
    %v185 = vsel %vm171, %v143, 0
    %v188 = vsel %vm171, %v144, 0
    %v191 = vsel %vm171, %v145, 0
    %v194 = vsel %vm171, %v146, 0
    %vm196 = vcmask 1040384
    %v197 = vsel 0, 4294967295, 65535
    %v198 = vsel %vm196, %v197, 0
    %v200 = vand.u32 %v165, %v198
    %v203 = vand.u32 %v166, %v198
    %v206 = vand.u32 %v167, %v198
    %208 = vmatprep.subr.bf16.mxu0 %v163
    %209 = vmatpush1.bf16.msra.mxu0 %v162
    %210 = vmatprep.subr.bf16.mxu0 %v203
    %211 = vmatpush1.bf16.msra.mxu0 %v200
    %212 = vmatprep.subr.bf16.mxu0 0
    %213 = vmatpush1.bf16.msra.mxu0 0
    %214 = vmatprep.subr.bf16.mxu0 0
    %215 = vmatpush1.bf16.msra.mxu0 0
    %216 = vmatprep.subr.bf16.mxu0 0
    %217 = vmatpush1.bf16.msra.mxu0 0
    %218 = vmatprep.subr.bf16.mxu0 0
    %219 = vmatpush1.bf16.msra.mxu0 0
    %220 = vmatprep.subr.bf16.mxu0 0
    %221 = vmatpush1.bf16.msra.mxu0 0
    %222 = vmatprep.subr.bf16.mxu0 0
    %223 = vmatpush1.bf16.msra.mxu0 0
    %224 = vmatprep.subr.bf16.mxu0 0
    %225 = vmatpush1.bf16.msra.mxu0 0
    %226 = vmatprep.subr.bf16.mxu0 0
    %227 = vmatpush1.bf16.msra.mxu0 0
    %228 = vmatprep.subr.bf16.mxu0 0
    %229 = vmatpush1.bf16.msra.mxu0 0
    %230 = vmatprep.subr.bf16.mxu0 0
    %231 = vmatpush1.bf16.msra.mxu0 0
    %232 = vmatprep.subr.bf16.mxu0 0
    %233 = vmatpush1.bf16.msra.mxu0 0
    %234 = vmatprep.subr.bf16.mxu0 0
    %235 = vmatpush1.bf16.msra.mxu0 0
    %236 = vmatprep.subr.bf16.mxu0 0
    %237 = vmatpush1.bf16.msra.mxu0 0
    %238 = vmatprep.subr.bf16.mxu0 0
    %239 = vmatpush1.bf16.msra.mxu0 0
    %240 = vmatprep.mubr.bf16.mxu0 0
    %241 = vmatmul.mubr.bf16.gmra.mrb[0].mxu0 %v173
    %v242 = vpop.f32.mrb[0].mxu0
    %v243 = vadd.f32 0.0, %v242
    %v244 = vpop.f32.mrb[0].mxu0
    %v245 = vadd.f32 0.0, %v244
    %v246 = vpop.f32.mrb[0].mxu0
    %v247 = vadd.f32 0.0, %v246
    %v248 = vpop.f32.mrb[0].mxu0
    %v249 = vadd.f32 0.0, %v248
    %250 = vmatprep.mubr.bf16.mxu0 0
    %251 = vmatmul.mubr.bf16.gmra.mrb[0].mxu0 %v176
    %v252 = vpop.f32.mrb[0].mxu0
    %v253 = vadd.f32 0.0, %v252
    %v254 = vpop.f32.mrb[0].mxu0
    %v255 = vadd.f32 0.0, %v254
    %v256 = vpop.f32.mrb[0].mxu0
    %v257 = vadd.f32 0.0, %v256
    %v258 = vpop.f32.mrb[0].mxu0
    %v259 = vadd.f32 0.0, %v258
    %260 = vmatprep.mubr.bf16.mxu0 0
    %261 = vmatmul.mubr.bf16.gmra.mrb[0].mxu0 %v179
    %v262 = vpop.f32.mrb[0].mxu0
    %v263 = vadd.f32 0.0, %v262
    %v264 = vpop.f32.mrb[0].mxu0
    %v265 = vadd.f32 0.0, %v264
    %v266 = vpop.f32.mrb[0].mxu0
    %v267 = vadd.f32 0.0, %v266
    %v268 = vpop.f32.mrb[0].mxu0
    %v269 = vadd.f32 0.0, %v268
    %270 = vmatprep.mubr.bf16.mxu0 0
    %271 = vmatmul.mubr.bf16.gmra.mrb[0].mxu0 %v182
    %v272 = vpop.f32.mrb[0].mxu0
    %v273 = vadd.f32 0.0, %v272
    %v274 = vpop.f32.mrb[0].mxu0
    %v275 = vadd.f32 0.0, %v274
    %v276 = vpop.f32.mrb[0].mxu0
    %v277 = vadd.f32 0.0, %v276
    %v278 = vpop.f32.mrb[0].mxu0
    %v279 = vadd.f32 0.0, %v278
    %280 = vmatprep.mubr.bf16.mxu0 0
    %281 = vmatmul.mubr.bf16.gmra.mrb[0].mxu0 %v185
    %v282 = vpop.f32.mrb[0].mxu0
    %v283 = vadd.f32 0.0, %v282
    %v284 = vpop.f32.mrb[0].mxu0
    %v285 = vadd.f32 0.0, %v284
    %v286 = vpop.f32.mrb[0].mxu0
    %v287 = vadd.f32 0.0, %v286
    %v288 = vpop.f32.mrb[0].mxu0
    %v289 = vadd.f32 0.0, %v288
    %290 = vmatprep.mubr.bf16.mxu0 0
    %291 = vmatmul.mubr.bf16.gmra.mrb[0].mxu0 %v188
    %v292 = vpop.f32.mrb[0].mxu0
    %v293 = vadd.f32 0.0, %v292
    %v294 = vpop.f32.mrb[0].mxu0
    %v295 = vadd.f32 0.0, %v294
    %v296 = vpop.f32.mrb[0].mxu0
    %v297 = vadd.f32 0.0, %v296
    %v298 = vpop.f32.mrb[0].mxu0
    %v299 = vadd.f32 0.0, %v298
    %300 = vmatprep.mubr.bf16.mxu0 0
    %301 = vmatmul.mubr.bf16.gmra.mrb[0].mxu0 %v191
    %v302 = vpop.f32.mrb[0].mxu0
    %v303 = vadd.f32 0.0, %v302
    %v304 = vpop.f32.mrb[0].mxu0
    %v305 = vadd.f32 0.0, %v304
    %v306 = vpop.f32.mrb[0].mxu0
    %v307 = vadd.f32 0.0, %v306
    %v308 = vpop.f32.mrb[0].mxu0
    %v309 = vadd.f32 0.0, %v308
    %310 = vmatprep.mubr.bf16.mxu0 0
    %311 = vmatmul.mubr.bf16.gmra.mrb[0].mxu0 %v194
    %v312 = vpop.f32.mrb[0].mxu0
    %v313 = vadd.f32 0.0, %v312
    %v314 = vpop.f32.mrb[0].mxu0
    %v315 = vadd.f32 0.0, %v314
    %v316 = vpop.f32.mrb[0].mxu0
    %v317 = vadd.f32 0.0, %v316
    %v318 = vpop.f32.mrb[0].mxu0
    %v319 = vadd.f32 0.0, %v318
    %320 = vdwg.mxu0
    %321 = vmatprep.subr.bf16.mxu0 0
    %322 = vmatpush1.bf16.msra.mxu0 %v164
    %323 = vmatprep.subr.bf16.mxu0 0
    %324 = vmatpush1.bf16.msra.mxu0 %v206
    %325 = vmatprep.subr.bf16.mxu0 0
    %326 = vmatpush1.bf16.msra.mxu0 0
    %327 = vmatprep.subr.bf16.mxu0 0
    %328 = vmatpush1.bf16.msra.mxu0 0
    %329 = vmatprep.subr.bf16.mxu0 0
    %330 = vmatpush1.bf16.msra.mxu0 0
    %331 = vmatprep.subr.bf16.mxu0 0
    %332 = vmatpush1.bf16.msra.mxu0 0
    %333 = vmatprep.subr.bf16.mxu0 0
    %334 = vmatpush1.bf16.msra.mxu0 0
    %335 = vmatprep.subr.bf16.mxu0 0
    %336 = vmatpush1.bf16.msra.mxu0 0
    %337 = vmatprep.subr.bf16.mxu0 0
    %338 = vmatpush1.bf16.msra.mxu0 0
    %339 = vmatprep.subr.bf16.mxu0 0
    %340 = vmatpush1.bf16.msra.mxu0 0
    %341 = vmatprep.subr.bf16.mxu0 0
    %342 = vmatpush1.bf16.msra.mxu0 0
    %343 = vmatprep.subr.bf16.mxu0 0
    %344 = vmatpush1.bf16.msra.mxu0 0
    %345 = vmatprep.subr.bf16.mxu0 0
    %346 = vmatpush1.bf16.msra.mxu0 0
    %347 = vmatprep.subr.bf16.mxu0 0
    %348 = vmatpush1.bf16.msra.mxu0 0
    %349 = vmatprep.subr.bf16.mxu0 0
    %350 = vmatpush1.bf16.msra.mxu0 0
    %351 = vmatprep.subr.bf16.mxu0 0
    %352 = vmatpush1.bf16.msra.mxu0 0
    %353 = vmatprep.mubr.bf16.mxu0 0
    %354 = vmatmul.mubr.bf16.gmra.mrb[0].mxu0 %v173
    %v355 = vpop.f32.mrb[0].mxu0
    %v356 = vadd.f32 0.0, %v355
    %v357 = vpop.f32.mrb[0].mxu0
    %v358 = vpop.f32.mrb[0].mxu0
    %v359 = vadd.f32 0.0, %v358
    %v360 = vpop.f32.mrb[0].mxu0
    %361 = vmatprep.mubr.bf16.mxu0 0
    %362 = vmatmul.mubr.bf16.gmra.mrb[0].mxu0 %v176
    %v363 = vpop.f32.mrb[0].mxu0
    %v364 = vadd.f32 0.0, %v363
    %v365 = vpop.f32.mrb[0].mxu0
    %v366 = vpop.f32.mrb[0].mxu0
    %v367 = vadd.f32 0.0, %v366
    %v368 = vpop.f32.mrb[0].mxu0
    %369 = vmatprep.mubr.bf16.mxu0 0
    %370 = vmatmul.mubr.bf16.gmra.mrb[0].mxu0 %v179
    %v371 = vpop.f32.mrb[0].mxu0
    %v372 = vadd.f32 0.0, %v371
    %v373 = vpop.f32.mrb[0].mxu0
    %v374 = vpop.f32.mrb[0].mxu0
    %v375 = vadd.f32 0.0, %v374
    %v376 = vpop.f32.mrb[0].mxu0
    %377 = vmatprep.mubr.bf16.mxu0 0
    %378 = vmatmul.mubr.bf16.gmra.mrb[0].mxu0 %v182
    %v379 = vpop.f32.mrb[0].mxu0
    %v380 = vadd.f32 0.0, %v379
    %v381 = vpop.f32.mrb[0].mxu0
    %v382 = vpop.f32.mrb[0].mxu0
    %v383 = vadd.f32 0.0, %v382
    %v384 = vpop.f32.mrb[0].mxu0
    %385 = vmatprep.mubr.bf16.mxu0 0
    %386 = vmatmul.mubr.bf16.gmra.mrb[0].mxu0 %v185
    %v387 = vpop.f32.mrb[0].mxu0
    %v388 = vadd.f32 0.0, %v387
    %v389 = vpop.f32.mrb[0].mxu0
    %v390 = vpop.f32.mrb[0].mxu0
    %v391 = vadd.f32 0.0, %v390
    %v392 = vpop.f32.mrb[0].mxu0
    %393 = vmatprep.mubr.bf16.mxu0 0
    %394 = vmatmul.mubr.bf16.gmra.mrb[0].mxu0 %v188
    %v395 = vpop.f32.mrb[0].mxu0
    %v396 = vadd.f32 0.0, %v395
    %v397 = vpop.f32.mrb[0].mxu0
    %v398 = vpop.f32.mrb[0].mxu0
    %v399 = vadd.f32 0.0, %v398
    %v400 = vpop.f32.mrb[0].mxu0
    %401 = vmatprep.mubr.bf16.mxu0 0
    %402 = vmatmul.mubr.bf16.gmra.mrb[0].mxu0 %v191
    %v403 = vpop.f32.mrb[0].mxu0
    %v404 = vadd.f32 0.0, %v403
    %v405 = vpop.f32.mrb[0].mxu0
    %v406 = vpop.f32.mrb[0].mxu0
    %v407 = vadd.f32 0.0, %v406
    %v408 = vpop.f32.mrb[0].mxu0
    %409 = vmatprep.mubr.bf16.mxu0 0
    %410 = vmatmul.mubr.bf16.gmra.mrb[0].mxu0 %v194
    %v411 = vpop.f32.mrb[0].mxu0
    %v412 = vadd.f32 0.0, %v411
    %v413 = vpop.f32.mrb[0].mxu0
    %v414 = vpop.f32.mrb[0].mxu0
    %v415 = vadd.f32 0.0, %v414
    %v416 = vpop.f32.mrb[0].mxu0
    %417 = vdwg.mxu0
    %418 = vst [vmem:[#allocation3] sm:$0xff] %v243
    %419 = vst [vmem:[#allocation3 + $0x8] sm:$0xff] %v245
    %420 = vst [vmem:[#allocation3 + $0x10] sm:$0xff] %v356
    %421 = vst [vmem:[#allocation3 + $0x18] sm:$0xff] %v247
    %422 = vst [vmem:[#allocation3 + $0x20] sm:$0xff] %v249
    %423 = vst [vmem:[#allocation3 + $0x28] sm:$0xff] %v359
    %424 = vst [vmem:[#allocation3 + $0x30] sm:$0xff] %v253
    %425 = vst [vmem:[#allocation3 + $0x38] sm:$0xff] %v255
    %426 = vst [vmem:[#allocation3 + $0x40] sm:$0xff] %v364
    %427 = vst [vmem:[#allocation3 + $0x48] sm:$0xff] %v257
    %428 = vst [vmem:[#allocation3 + $0x50] sm:$0xff] %v259
    %429 = vst [vmem:[#allocation3 + $0x58] sm:$0xff] %v367
    %430 = vst [vmem:[#allocation3 + $0x60] sm:$0xff] %v263
    %431 = vst [vmem:[#allocation3 + $0x68] sm:$0xff] %v265
    %432 = vst [vmem:[#allocation3 + $0x70] sm:$0xff] %v372
    %433 = vst [vmem:[#allocation3 + $0x78] sm:$0xff] %v267
    %434 = vst [vmem:[#allocation3 + $0x80] sm:$0xff] %v269
    %435 = vst [vmem:[#allocation3 + $0x88] sm:$0xff] %v375
    %436 = vst [vmem:[#allocation3 + $0x90] sm:$0xff] %v273
    %437 = vst [vmem:[#allocation3 + $0x98] sm:$0xff] %v275
    %438 = vst [vmem:[#allocation3 + $0xa0] sm:$0xff] %v380
    %439 = vst [vmem:[#allocation3 + $0xa8] sm:$0xff] %v277
    %440 = vst [vmem:[#allocation3 + $0xb0] sm:$0xff] %v279
    %441 = vst [vmem:[#allocation3 + $0xb8] sm:$0xff] %v383
    %442 = vst [vmem:[#allocation3 + $0xc0] sm:$0xff] %v283
    %443 = vst [vmem:[#allocation3 + $0xc8] sm:$0xff] %v285
    %444 = vst [vmem:[#allocation3 + $0xd0] sm:$0xff] %v388
    %445 = vst [vmem:[#allocation3 + $0xd8] sm:$0xff] %v287
    %446 = vst [vmem:[#allocation3 + $0xe0] sm:$0xff] %v289
    %447 = vst [vmem:[#allocation3 + $0xe8] sm:$0xff] %v391
    %448 = vst [vmem:[#allocation3 + $0xf0] sm:$0xff] %v293
    %449 = vst [vmem:[#allocation3 + $0xf8] sm:$0xff] %v295
    %450 = vst [vmem:[#allocation3 + $0x100] sm:$0xff] %v396
    %451 = vst [vmem:[#allocation3 + $0x108] sm:$0xff] %v297
    %452 = vst [vmem:[#allocation3 + $0x110] sm:$0xff] %v299
    %453 = vst [vmem:[#allocation3 + $0x118] sm:$0xff] %v399
    %454 = vst [vmem:[#allocation3 + $0x120] sm:$0xff] %v303
    %455 = vst [vmem:[#allocation3 + $0x128] sm:$0xff] %v305
    %456 = vst [vmem:[#allocation3 + $0x130] sm:$0xff] %v404
    %457 = vst [vmem:[#allocation3 + $0x138] sm:$0xff] %v307
    %458 = vst [vmem:[#allocation3 + $0x140] sm:$0xff] %v309
    %459 = vst [vmem:[#allocation3 + $0x148] sm:$0xff] %v407
    %460 = vst [vmem:[#allocation3 + $0x150] sm:$0xff] %v313
    %461 = vst [vmem:[#allocation3 + $0x158] sm:$0xff] %v315
    %462 = vst [vmem:[#allocation3 + $0x160] sm:$0xff] %v412
    %463 = vst [vmem:[#allocation3 + $0x168] sm:$0xff] %v317
    %464 = vst [vmem:[#allocation3 + $0x170] sm:$0xff] %v319
    %465 = vst [vmem:[#allocation3 + $0x178] sm:$0xff] %v415
    %v466 = vld [vmem:[#allocation10] sm:$0xff]
    %v467 = vld [vmem:[#allocation10 + $0x8] sm:$0xf]
    %v468 = vld [vmem:[#allocation10 + $0xc] sm:$0xff]
    %v469 = vld [vmem:[#allocation10 + $0x14] sm:$0xf]
    %v470 = vld [vmem:[#allocation10 + $0x18] sm:$0xff]
    %v471 = vld [vmem:[#allocation10 + $0x20] sm:$0xf]
    %v472 = vld [vmem:[#allocation10 + $0x24] sm:$0xff]
    %v473 = vld [vmem:[#allocation10 + $0x2c] sm:$0xf]
    %v474 = vld [vmem:[#allocation10 + $0x30] sm:$0xff]
    %v475 = vld [vmem:[#allocation10 + $0x38] sm:$0xf]
    %v476 = vld [vmem:[#allocation10 + $0x3c] sm:$0xff]
    %v477 = vld [vmem:[#allocation10 + $0x44] sm:$0xf]
    %v478 = vld [vmem:[#allocation10 + $0x48] sm:$0xff]
    %v479 = vld [vmem:[#allocation10 + $0x50] sm:$0xf]
    %v480 = vld [vmem:[#allocation10 + $0x54] sm:$0xff]
    %v481 = vld [vmem:[#allocation10 + $0x5c] sm:$0xf]
    %v482 = vld [vmem:[#allocation10 + $0x60] sm:$0xff]
    %v483 = vld [vmem:[#allocation10 + $0x68] sm:$0xf]
    %v484 = vld [vmem:[#allocation10 + $0x6c] sm:$0xff]
    %v485 = vld [vmem:[#allocation10 + $0x74] sm:$0xf]
    %v486 = vld [vmem:[#allocation10 + $0x78] sm:$0xff]
    %v487 = vld [vmem:[#allocation10 + $0x80] sm:$0xf]
    %v488 = vld [vmem:[#allocation10 + $0x84] sm:$0xff]
    %v489 = vld [vmem:[#allocation10 + $0x8c] sm:$0xf]
    %v490 = vld [vmem:[#allocation10 + $0x90] sm:$0xff]
    %v491 = vld [vmem:[#allocation10 + $0x98] sm:$0xf]
    %v492 = vld [vmem:[#allocation10 + $0x9c] sm:$0xff]
    %v493 = vld [vmem:[#allocation10 + $0xa4] sm:$0xf]
    %v494 = vld [vmem:[#allocation10 + $0xa8] sm:$0xff]
    %v495 = vld [vmem:[#allocation10 + $0xb0] sm:$0xf]
    %v496 = vld [vmem:[#allocation10 + $0xb4] sm:$0xff]
    %v497 = vld [vmem:[#allocation10 + $0xbc] sm:$0xf]
    %v498 = vld [vmem:[#allocation2] sm:$0xff]
    %v499 = vld [vmem:[#allocation2 + $0x8] sm:$0xff]
    %v500 = vld [vmem:[#allocation3] sm:$0xff]
    %v501 = vld [vmem:[#allocation3 + $0x8] sm:$0xff]
    %v502 = vld [vmem:[#allocation3 + $0x10] sm:$0xff]
    %v503 = vld [vmem:[#allocation3 + $0x18] sm:$0xff]
    %v504 = vld [vmem:[#allocation3 + $0x20] sm:$0xff]
    %v505 = vld [vmem:[#allocation3 + $0x28] sm:$0xff]
    %v506 = vpack.c.bf16 %v499, %v498
    %v539 = vunpack.c.l.b16 %v466
    %v540 = vunpack.c.h.b16 %v466
    %v541 = vunpack.c.l.b16 %v467
    %v542 = vunpack.c.l.b16 %v468
    %v543 = vunpack.c.h.b16 %v468
    %v544 = vunpack.c.l.b16 %v469
    %v545 = vunpack.c.l.b16 %v470
    %v546 = vunpack.c.h.b16 %v470
    %v547 = vunpack.c.l.b16 %v471
    %v548 = vunpack.c.l.b16 %v472
    %v549 = vunpack.c.h.b16 %v472
    %v550 = vunpack.c.l.b16 %v473
    %v551 = vunpack.c.l.b16 %v474
    %v552 = vunpack.c.h.b16 %v474
    %v553 = vunpack.c.l.b16 %v475
    %v554 = vunpack.c.l.b16 %v476
    %v555 = vunpack.c.h.b16 %v476
    %v556 = vunpack.c.l.b16 %v477
    %v557 = vunpack.c.l.b16 %v478
    %v558 = vunpack.c.h.b16 %v478
    %v559 = vunpack.c.l.b16 %v479
    %v560 = vunpack.c.l.b16 %v480
    %v561 = vunpack.c.h.b16 %v480
    %v562 = vunpack.c.l.b16 %v481
    %v563 = vunpack.c.l.b16 %v482
    %v564 = vunpack.c.h.b16 %v482
    %v565 = vunpack.c.l.b16 %v483
    %v566 = vunpack.c.l.b16 %v484
    %v567 = vunpack.c.h.b16 %v484
    %v568 = vunpack.c.l.b16 %v485
    %v569 = vunpack.c.l.b16 %v486
    %v570 = vunpack.c.h.b16 %v486
    %v571 = vunpack.c.l.b16 %v487
    %v572 = vunpack.c.l.b16 %v488
    %v573 = vunpack.c.h.b16 %v488
    %v574 = vunpack.c.l.b16 %v489
    %v575 = vunpack.c.l.b16 %v490
    %v576 = vunpack.c.h.b16 %v490
    %v577 = vunpack.c.l.b16 %v491
    %v578 = vunpack.c.l.b16 %v492
    %v579 = vunpack.c.h.b16 %v492
    %v580 = vunpack.c.l.b16 %v493
    %v581 = vunpack.c.l.b16 %v494
    %v582 = vunpack.c.h.b16 %v494
    %v583 = vunpack.c.l.b16 %v495
    %v584 = vunpack.c.l.b16 %v496
    %v585 = vunpack.c.h.b16 %v496
    %v586 = vunpack.c.l.b16 %v497
    %v587 = vpack.c.b16 %v542, %v539
    %v588 = vpack.c.b16 %v543, %v540
    %v589 = vpack.c.b16 %v544, %v541
    %v590 = vpack.c.b16 %v548, %v545
    %v591 = vpack.c.b16 %v549, %v546
    %v592 = vpack.c.b16 %v550, %v547
    %v593 = vpack.c.b16 %v554, %v551
    %v594 = vpack.c.b16 %v555, %v552
    %v595 = vpack.c.b16 %v556, %v553
    %v596 = vpack.c.b16 %v560, %v557
    %v597 = vpack.c.b16 %v561, %v558
    %v598 = vpack.c.b16 %v562, %v559
    %v599 = vpack.c.b16 %v566, %v563
    %v600 = vpack.c.b16 %v567, %v564
    %v601 = vpack.c.b16 %v568, %v565
    %v602 = vpack.c.b16 %v572, %v569
    %v603 = vpack.c.b16 %v573, %v570
    %v604 = vpack.c.b16 %v574, %v571
    %v605 = vpack.c.b16 %v578, %v575
    %v606 = vpack.c.b16 %v579, %v576
    %v607 = vpack.c.b16 %v580, %v577
    %v608 = vpack.c.b16 %v584, %v581
    %v609 = vpack.c.b16 %v585, %v582
    %v610 = vpack.c.b16 %v586, %v583
    %635 = vmatprep.subr.bf16.mxu0 %v588
    %636 = vmatpush1.bf16.msra.mxu0 %v587
    %637 = vmatprep.subr.bf16.mxu0 %v591
    %638 = vmatpush1.bf16.msra.mxu0 %v590
    %639 = vmatprep.subr.bf16.mxu0 %v594
    %640 = vmatpush1.bf16.msra.mxu0 %v593
    %641 = vmatprep.subr.bf16.mxu0 %v597
    %642 = vmatpush1.bf16.msra.mxu0 %v596
    %643 = vmatprep.subr.bf16.mxu0 %v600
    %644 = vmatpush1.bf16.msra.mxu0 %v599
    %645 = vmatprep.subr.bf16.mxu0 %v603
    %646 = vmatpush1.bf16.msra.mxu0 %v602
    %647 = vmatprep.subr.bf16.mxu0 %v606
    %648 = vmatpush1.bf16.msra.mxu0 %v605
    %649 = vmatprep.subr.bf16.mxu0 %v609
    %650 = vmatpush1.bf16.msra.mxu0 %v608
    %651 = vmatprep.subr.bf16.mxu0 0
    %652 = vmatpush1.bf16.msra.mxu0 0
    %653 = vmatprep.subr.bf16.mxu0 0
    %654 = vmatpush1.bf16.msra.mxu0 0
    %655 = vmatprep.subr.bf16.mxu0 0
    %656 = vmatpush1.bf16.msra.mxu0 0
    %657 = vmatprep.subr.bf16.mxu0 0
    %658 = vmatpush1.bf16.msra.mxu0 0
    %659 = vmatprep.subr.bf16.mxu0 0
    %660 = vmatpush1.bf16.msra.mxu0 0
    %661 = vmatprep.subr.bf16.mxu0 0
    %662 = vmatpush1.bf16.msra.mxu0 0
    %663 = vmatprep.subr.bf16.mxu0 0
    %664 = vmatpush1.bf16.msra.mxu0 0
    %665 = vmatprep.subr.bf16.mxu0 0
    %666 = vmatpush1.bf16.msra.mxu0 0
    %667 = vmatprep.mubr.bf16.mxu0 0
    %668 = vmatmul.mubr.bf16.gmra.mrb[0].mxu0 %v506
    %v669 = vpop.f32.mrb[0].mxu0
    %v670 = vadd.f32 0.0, %v669
    %v671 = vpop.f32.mrb[0].mxu0
    %v672 = vadd.f32 0.0, %v671
    %v673 = vpop.f32.mrb[0].mxu0
    %v674 = vadd.f32 0.0, %v673
    %v675 = vpop.f32.mrb[0].mxu0
    %v676 = vadd.f32 0.0, %v675
    %677 = vdwg.mxu0
    %678 = vmatprep.subr.bf16.mxu0 0
    %679 = vmatpush1.bf16.msra.mxu0 %v589
    %680 = vmatprep.subr.bf16.mxu0 0
    %681 = vmatpush1.bf16.msra.mxu0 %v592
    %682 = vmatprep.subr.bf16.mxu0 0
    %683 = vmatpush1.bf16.msra.mxu0 %v595
    %684 = vmatprep.subr.bf16.mxu0 0
    %685 = vmatpush1.bf16.msra.mxu0 %v598
    %686 = vmatprep.subr.bf16.mxu0 0
    %687 = vmatpush1.bf16.msra.mxu0 %v601
    %688 = vmatprep.subr.bf16.mxu0 0
    %689 = vmatpush1.bf16.msra.mxu0 %v604
    %690 = vmatprep.subr.bf16.mxu0 0
    %691 = vmatpush1.bf16.msra.mxu0 %v607
    %692 = vmatprep.subr.bf16.mxu0 0
    %693 = vmatpush1.bf16.msra.mxu0 %v610
    %694 = vmatprep.subr.bf16.mxu0 0
    %695 = vmatpush1.bf16.msra.mxu0 0
    %696 = vmatprep.subr.bf16.mxu0 0
    %697 = vmatpush1.bf16.msra.mxu0 0
    %698 = vmatprep.subr.bf16.mxu0 0
    %699 = vmatpush1.bf16.msra.mxu0 0
    %700 = vmatprep.subr.bf16.mxu0 0
    %701 = vmatpush1.bf16.msra.mxu0 0
    %702 = vmatprep.subr.bf16.mxu0 0
    %703 = vmatpush1.bf16.msra.mxu0 0
    %704 = vmatprep.subr.bf16.mxu0 0
    %705 = vmatpush1.bf16.msra.mxu0 0
    %706 = vmatprep.subr.bf16.mxu0 0
    %707 = vmatpush1.bf16.msra.mxu0 0
    %708 = vmatprep.subr.bf16.mxu0 0
    %709 = vmatpush1.bf16.msra.mxu0 0
    %710 = vmatprep.mubr.bf16.mxu0 0
    %711 = vmatmul.mubr.bf16.gmra.mrb[0].mxu0 %v506
    %v712 = vpop.f32.mrb[0].mxu0
    %v713 = vadd.f32 0.0, %v712
    %v714 = vpop.f32.mrb[0].mxu0
    %v715 = vpop.f32.mrb[0].mxu0
    %v716 = vadd.f32 0.0, %v715
    %v717 = vpop.f32.mrb[0].mxu0
    %718 = vdwg.mxu0
    %v719 = vadd.f32 %v500, %v670
    %v720 = vadd.f32 %v503, %v674
    %v721 = vxor.u32 %v719, 2147483648
    %v722 = vxor.u32 %v720, 2147483648
    %v723 = vmul.f32 %v721, 1.442695
    %v724 = vpow.pop %v723
    %v725 = vmul.f32 %v722, 1.442695
    %v726 = vpow.pop %v725
    %v727 = vadd.f32 %v724, 1.0
    %v728 = vadd.f32 %v726, 1.0
    %v729 = vrcp.pop %v727
    %v730 = vmul.f32 1.0, %v729
    %v731 = vrcp.pop %v728
    %v732 = vmul.f32 1.0, %v731
    %v733 = vadd.f32 %v501, %v672
    %v734 = vadd.f32 %v504, %v676
    %v735 = vxor.u32 %v733, 2147483648
    %v736 = vxor.u32 %v734, 2147483648
    %v737 = vmul.f32 %v735, 1.442695
    %v738 = vpow.pop %v737
    %v739 = vmul.f32 %v736, 1.442695
    %v740 = vpow.pop %v739
    %v741 = vadd.f32 %v738, 1.0
    %v742 = vadd.f32 %v740, 1.0
    %v743 = vrcp.pop %v741
    %v744 = vmul.f32 1.0, %v743
    %v745 = vrcp.pop %v742
    %v746 = vmul.f32 1.0, %v745
    %v747 = vmul.f32 %v730, %v713
    %v748 = vmul.f32 %v732, %v716
    %v749 = vadd.f32 %v502, %v747
    %v750 = vadd.f32 %v505, %v748
    %v751 = vtanh.pop %v749
    %v752 = vtanh.pop %v750
    %v753 = vsub.f32 %v498, %v751
    %v754 = vsub.f32 %v499, %v752
    %v755 = vmul.f32 %v744, %v753
    %v756 = vmul.f32 %v746, %v754
    %v757 = vadd.f32 %v751, %v755
    %v758 = vadd.f32 %v752, %v756
    %v759 = vpack.c.bf16 %v758, %v757
    %v761 = vunpack.c.l.b16 %v759
    %v762 = vunpack.c.h.b16 %v759
    %v763 = vpack.c.b16 %v761, %v761
    %v764 = vpack.c.b16 %v762, %v762
    %767 = vst [vmem:[#allocation12] sm:$0xf] %v763
    %768 = vst [vmem:[#allocation12 + $0x4] sm:$0xf] %v764
    %s769 = scalar_lea.vmem [#allocation3], 48
    %v770 = vld [vmem:[%s769] sm:$0xff]
    %v771 = vld [vmem:[%s769 + $0x8] sm:$0xff]
    %v772 = vld [vmem:[%s769 + $0x10] sm:$0xff]
    %v773 = vld [vmem:[%s769 + $0x18] sm:$0xff]
    %v774 = vld [vmem:[%s769 + $0x20] sm:$0xff]
    %v775 = vld [vmem:[%s769 + $0x28] sm:$0xff]
    %776 = vmatprep.subr.bf16.mxu0 %v588
    %777 = vmatpush1.bf16.msra.mxu0 %v587
    %778 = vmatprep.subr.bf16.mxu0 %v591
    %779 = vmatpush1.bf16.msra.mxu0 %v590
    %780 = vmatprep.subr.bf16.mxu0 %v594
    %781 = vmatpush1.bf16.msra.mxu0 %v593
    %782 = vmatprep.subr.bf16.mxu0 %v597
    %783 = vmatpush1.bf16.msra.mxu0 %v596
    %784 = vmatprep.subr.bf16.mxu0 %v600
    %785 = vmatpush1.bf16.msra.mxu0 %v599
    %786 = vmatprep.subr.bf16.mxu0 %v603
    %787 = vmatpush1.bf16.msra.mxu0 %v602
    %788 = vmatprep.subr.bf16.mxu0 %v606
    %789 = vmatpush1.bf16.msra.mxu0 %v605
    %790 = vmatprep.subr.bf16.mxu0 %v609
    %791 = vmatpush1.bf16.msra.mxu0 %v608
    %792 = vmatprep.subr.bf16.mxu0 0
    %793 = vmatpush1.bf16.msra.mxu0 0
    %794 = vmatprep.subr.bf16.mxu0 0
    %795 = vmatpush1.bf16.msra.mxu0 0
    %796 = vmatprep.subr.bf16.mxu0 0
    %797 = vmatpush1.bf16.msra.mxu0 0
    %798 = vmatprep.subr.bf16.mxu0 0
    %799 = vmatpush1.bf16.msra.mxu0 0
    %800 = vmatprep.subr.bf16.mxu0 0
    %801 = vmatpush1.bf16.msra.mxu0 0
    %802 = vmatprep.subr.bf16.mxu0 0
    %803 = vmatpush1.bf16.msra.mxu0 0
    %804 = vmatprep.subr.bf16.mxu0 0
    %805 = vmatpush1.bf16.msra.mxu0 0
    %806 = vmatprep.subr.bf16.mxu0 0
    %807 = vmatpush1.bf16.msra.mxu0 0
    %808 = vmatprep.mubr.bf16.mxu0 0
    %809 = vmatmul.mubr.bf16.gmra.mrb[0].mxu0 %v759
    %v810 = vpop.f32.mrb[0].mxu0
    %v811 = vadd.f32 0.0, %v810
    %v812 = vpop.f32.mrb[0].mxu0
    %v813 = vadd.f32 0.0, %v812
    %v814 = vpop.f32.mrb[0].mxu0
    %v815 = vadd.f32 0.0, %v814
    %v816 = vpop.f32.mrb[0].mxu0
    %v817 = vadd.f32 0.0, %v816
    %818 = vdwg.mxu0
    %819 = vmatprep.subr.bf16.mxu0 0
    %820 = vmatpush1.bf16.msra.mxu0 %v589
    %821 = vmatprep.subr.bf16.mxu0 0
    %822 = vmatpush1.bf16.msra.mxu0 %v592
    %823 = vmatprep.subr.bf16.mxu0 0
    %824 = vmatpush1.bf16.msra.mxu0 %v595
    %825 = vmatprep.subr.bf16.mxu0 0
    %826 = vmatpush1.bf16.msra.mxu0 %v598
    %827 = vmatprep.subr.bf16.mxu0 0
    %828 = vmatpush1.bf16.msra.mxu0 %v601
    %829 = vmatprep.subr.bf16.mxu0 0
    %830 = vmatpush1.bf16.msra.mxu0 %v604
    %831 = vmatprep.subr.bf16.mxu0 0
    %832 = vmatpush1.bf16.msra.mxu0 %v607
    %833 = vmatprep.subr.bf16.mxu0 0
    %834 = vmatpush1.bf16.msra.mxu0 %v610
    %835 = vmatprep.subr.bf16.mxu0 0
    %836 = vmatpush1.bf16.msra.mxu0 0
    %837 = vmatprep.subr.bf16.mxu0 0
    %838 = vmatpush1.bf16.msra.mxu0 0
    %839 = vmatprep.subr.bf16.mxu0 0
    %840 = vmatpush1.bf16.msra.mxu0 0
    %841 = vmatprep.subr.bf16.mxu0 0
    %842 = vmatpush1.bf16.msra.mxu0 0
    %843 = vmatprep.subr.bf16.mxu0 0
    %844 = vmatpush1.bf16.msra.mxu0 0
    %845 = vmatprep.subr.bf16.mxu0 0
    %846 = vmatpush1.bf16.msra.mxu0 0
    %847 = vmatprep.subr.bf16.mxu0 0
    %848 = vmatpush1.bf16.msra.mxu0 0
    %849 = vmatprep.subr.bf16.mxu0 0
    %850 = vmatpush1.bf16.msra.mxu0 0
    %851 = vmatprep.mubr.bf16.mxu0 0
    %852 = vmatmul.mubr.bf16.gmra.mrb[0].mxu0 %v759
    %v853 = vpop.f32.mrb[0].mxu0
    %v854 = vadd.f32 0.0, %v853
    %v855 = vpop.f32.mrb[0].mxu0
    %v856 = vpop.f32.mrb[0].mxu0
    %v857 = vadd.f32 0.0, %v856
    %v858 = vpop.f32.mrb[0].mxu0
    %859 = vdwg.mxu0
    %v860 = vadd.f32 %v770, %v811
    %v861 = vadd.f32 %v773, %v815
    %v862 = vxor.u32 %v860, 2147483648
    %v863 = vxor.u32 %v861, 2147483648
    %v864 = vmul.f32 %v862, 1.442695
    %v865 = vpow.pop %v864
    %v866 = vmul.f32 %v863, 1.442695
    %v867 = vpow.pop %v866
    %v868 = vadd.f32 %v865, 1.0
    %v869 = vadd.f32 %v867, 1.0
    %v870 = vrcp.pop %v868
    %v871 = vmul.f32 1.0, %v870
    %v872 = vrcp.pop %v869
    %v873 = vmul.f32 1.0, %v872
    %v874 = vadd.f32 %v771, %v813
    %v875 = vadd.f32 %v774, %v817
    %v876 = vxor.u32 %v874, 2147483648
    %v877 = vxor.u32 %v875, 2147483648
    %v878 = vmul.f32 %v876, 1.442695
    %v879 = vpow.pop %v878
    %v880 = vmul.f32 %v877, 1.442695
    %v881 = vpow.pop %v880
    %v882 = vadd.f32 %v879, 1.0
    %v883 = vadd.f32 %v881, 1.0
    %v884 = vrcp.pop %v882
    %v885 = vmul.f32 1.0, %v884
    %v886 = vrcp.pop %v883
    %v887 = vmul.f32 1.0, %v886
    %v888 = vmul.f32 %v871, %v854
    %v889 = vmul.f32 %v873, %v857
    %v890 = vadd.f32 %v772, %v888
    %v891 = vadd.f32 %v775, %v889
    %v892 = vtanh.pop %v890
    %v893 = vtanh.pop %v891
    %v894 = vsub.f32 %v757, %v892
    %v895 = vsub.f32 %v758, %v893
    %v896 = vmul.f32 %v885, %v894
    %v897 = vmul.f32 %v887, %v895
    %v898 = vadd.f32 %v892, %v896
    %v899 = vadd.f32 %v893, %v897
    %v900 = vpack.c.bf16 %v899, %v898
    %v902 = vunpack.c.l.b16 %v900
    %v903 = vunpack.c.h.b16 %v900
    %v904 = vpack.c.b16 %v902, %v902
    %v905 = vpack.c.b16 %v903, %v903
    %s908 = scalar_lea.vmem [#allocation12], 8
    %909 = vst [vmem:[%s908] sm:$0xf] %v904
    %910 = vst [vmem:[%s908 + $0x4] sm:$0xf] %v905
    %s911 = scalar_lea.vmem [#allocation3], 96
    %v912 = vld [vmem:[%s911] sm:$0xff]
    %v913 = vld [vmem:[%s911 + $0x8] sm:$0xff]
    %v914 = vld [vmem:[%s911 + $0x10] sm:$0xff]
    %v915 = vld [vmem:[%s911 + $0x18] sm:$0xff]
    %v916 = vld [vmem:[%s911 + $0x20] sm:$0xff]
    %v917 = vld [vmem:[%s911 + $0x28] sm:$0xff]
    %918 = vmatprep.subr.bf16.mxu0 %v588
    %919 = vmatpush1.bf16.msra.mxu0 %v587
    %920 = vmatprep.subr.bf16.mxu0 %v591
    %921 = vmatpush1.bf16.msra.mxu0 %v590
    %922 = vmatprep.subr.bf16.mxu0 %v594
    %923 = vmatpush1.bf16.msra.mxu0 %v593
    %924 = vmatprep.subr.bf16.mxu0 %v597
    %925 = vmatpush1.bf16.msra.mxu0 %v596
    %926 = vmatprep.subr.bf16.mxu0 %v600
    %927 = vmatpush1.bf16.msra.mxu0 %v599
    %928 = vmatprep.subr.bf16.mxu0 %v603
    %929 = vmatpush1.bf16.msra.mxu0 %v602
    %930 = vmatprep.subr.bf16.mxu0 %v606
    %931 = vmatpush1.bf16.msra.mxu0 %v605
    %932 = vmatprep.subr.bf16.mxu0 %v609
    %933 = vmatpush1.bf16.msra.mxu0 %v608
    %934 = vmatprep.subr.bf16.mxu0 0
    %935 = vmatpush1.bf16.msra.mxu0 0
    %936 = vmatprep.subr.bf16.mxu0 0
    %937 = vmatpush1.bf16.msra.mxu0 0
    %938 = vmatprep.subr.bf16.mxu0 0
    %939 = vmatpush1.bf16.msra.mxu0 0
    %940 = vmatprep.subr.bf16.mxu0 0
    %941 = vmatpush1.bf16.msra.mxu0 0
    %942 = vmatprep.subr.bf16.mxu0 0
    %943 = vmatpush1.bf16.msra.mxu0 0
    %944 = vmatprep.subr.bf16.mxu0 0
    %945 = vmatpush1.bf16.msra.mxu0 0
    %946 = vmatprep.subr.bf16.mxu0 0
    %947 = vmatpush1.bf16.msra.mxu0 0
    %948 = vmatprep.subr.bf16.mxu0 0
    %949 = vmatpush1.bf16.msra.mxu0 0
    %950 = vmatprep.mubr.bf16.mxu0 0
    %951 = vmatmul.mubr.bf16.gmra.mrb[0].mxu0 %v900
    %v952 = vpop.f32.mrb[0].mxu0
    %v953 = vadd.f32 0.0, %v952
    %v954 = vpop.f32.mrb[0].mxu0
    %v955 = vadd.f32 0.0, %v954
    %v956 = vpop.f32.mrb[0].mxu0
    %v957 = vadd.f32 0.0, %v956
    %v958 = vpop.f32.mrb[0].mxu0
    %v959 = vadd.f32 0.0, %v958
    %960 = vdwg.mxu0
    %961 = vmatprep.subr.bf16.mxu0 0
    %962 = vmatpush1.bf16.msra.mxu0 %v589
    %963 = vmatprep.subr.bf16.mxu0 0
    %964 = vmatpush1.bf16.msra.mxu0 %v592
    %965 = vmatprep.subr.bf16.mxu0 0
    %966 = vmatpush1.bf16.msra.mxu0 %v595
    %967 = vmatprep.subr.bf16.mxu0 0
    %968 = vmatpush1.bf16.msra.mxu0 %v598
    %969 = vmatprep.subr.bf16.mxu0 0
    %970 = vmatpush1.bf16.msra.mxu0 %v601
    %971 = vmatprep.subr.bf16.mxu0 0
    %972 = vmatpush1.bf16.msra.mxu0 %v604
    %973 = vmatprep.subr.bf16.mxu0 0
    %974 = vmatpush1.bf16.msra.mxu0 %v607
    %975 = vmatprep.subr.bf16.mxu0 0
    %976 = vmatpush1.bf16.msra.mxu0 %v610
    %977 = vmatprep.subr.bf16.mxu0 0
    %978 = vmatpush1.bf16.msra.mxu0 0
    %979 = vmatprep.subr.bf16.mxu0 0
    %980 = vmatpush1.bf16.msra.mxu0 0
    %981 = vmatprep.subr.bf16.mxu0 0
    %982 = vmatpush1.bf16.msra.mxu0 0
    %983 = vmatprep.subr.bf16.mxu0 0
    %984 = vmatpush1.bf16.msra.mxu0 0
    %985 = vmatprep.subr.bf16.mxu0 0
    %986 = vmatpush1.bf16.msra.mxu0 0
    %987 = vmatprep.subr.bf16.mxu0 0
    %988 = vmatpush1.bf16.msra.mxu0 0
    %989 = vmatprep.subr.bf16.mxu0 0
    %990 = vmatpush1.bf16.msra.mxu0 0
    %991 = vmatprep.subr.bf16.mxu0 0
    %992 = vmatpush1.bf16.msra.mxu0 0
    %993 = vmatprep.mubr.bf16.mxu0 0
    %994 = vmatmul.mubr.bf16.gmra.mrb[0].mxu0 %v900
    %v995 = vpop.f32.mrb[0].mxu0
    %v996 = vadd.f32 0.0, %v995
    %v997 = vpop.f32.mrb[0].mxu0
    %v998 = vpop.f32.mrb[0].mxu0
    %v999 = vadd.f32 0.0, %v998
    %v1000 = vpop.f32.mrb[0].mxu0
    %1001 = vdwg.mxu0
    %v1002 = vadd.f32 %v912, %v953
    %v1003 = vadd.f32 %v915, %v957
    %v1004 = vxor.u32 %v1002, 2147483648
    %v1005 = vxor.u32 %v1003, 2147483648
    %v1006 = vmul.f32 %v1004, 1.442695
    %v1007 = vpow.pop %v1006
    %v1008 = vmul.f32 %v1005, 1.442695
    %v1009 = vpow.pop %v1008
    %v1010 = vadd.f32 %v1007, 1.0
    %v1011 = vadd.f32 %v1009, 1.0
    %v1012 = vrcp.pop %v1010
    %v1013 = vmul.f32 1.0, %v1012
    %v1014 = vrcp.pop %v1011
    %v1015 = vmul.f32 1.0, %v1014
    %v1016 = vadd.f32 %v913, %v955
    %v1017 = vadd.f32 %v916, %v959
    %v1018 = vxor.u32 %v1016, 2147483648
    %v1019 = vxor.u32 %v1017, 2147483648
    %v1020 = vmul.f32 %v1018, 1.442695
    %v1021 = vpow.pop %v1020
    %v1022 = vmul.f32 %v1019, 1.442695
    %v1023 = vpow.pop %v1022
    %v1024 = vadd.f32 %v1021, 1.0
    %v1025 = vadd.f32 %v1023, 1.0
    %v1026 = vrcp.pop %v1024
    %v1027 = vmul.f32 1.0, %v1026
    %v1028 = vrcp.pop %v1025
    %v1029 = vmul.f32 1.0, %v1028
    %v1030 = vmul.f32 %v1013, %v996
    %v1031 = vmul.f32 %v1015, %v999
    %v1032 = vadd.f32 %v914, %v1030
    %v1033 = vadd.f32 %v917, %v1031
    %v1034 = vtanh.pop %v1032
    %v1035 = vtanh.pop %v1033
    %v1036 = vsub.f32 %v898, %v1034
    %v1037 = vsub.f32 %v899, %v1035
    %v1038 = vmul.f32 %v1027, %v1036
    %v1039 = vmul.f32 %v1029, %v1037
    %v1040 = vadd.f32 %v1034, %v1038
    %v1041 = vadd.f32 %v1035, %v1039
    %v1042 = vpack.c.bf16 %v1041, %v1040
    %v1044 = vunpack.c.l.b16 %v1042
    %v1045 = vunpack.c.h.b16 %v1042
    %v1046 = vpack.c.b16 %v1044, %v1044
    %v1047 = vpack.c.b16 %v1045, %v1045
    %s1050 = scalar_lea.vmem [#allocation12], 16
    %1051 = vst [vmem:[%s1050] sm:$0xf] %v1046
    %1052 = vst [vmem:[%s1050 + $0x4] sm:$0xf] %v1047
    %s1053 = scalar_lea.vmem [#allocation3], 144
    %v1054 = vld [vmem:[%s1053] sm:$0xff]
    %v1055 = vld [vmem:[%s1053 + $0x8] sm:$0xff]
    %v1056 = vld [vmem:[%s1053 + $0x10] sm:$0xff]
    %v1057 = vld [vmem:[%s1053 + $0x18] sm:$0xff]
    %v1058 = vld [vmem:[%s1053 + $0x20] sm:$0xff]
    %v1059 = vld [vmem:[%s1053 + $0x28] sm:$0xff]
    %1060 = vmatprep.subr.bf16.mxu0 %v588
    %1061 = vmatpush1.bf16.msra.mxu0 %v587
    %1062 = vmatprep.subr.bf16.mxu0 %v591
    %1063 = vmatpush1.bf16.msra.mxu0 %v590
    %1064 = vmatprep.subr.bf16.mxu0 %v594
    %1065 = vmatpush1.bf16.msra.mxu0 %v593
    %1066 = vmatprep.subr.bf16.mxu0 %v597
    %1067 = vmatpush1.bf16.msra.mxu0 %v596
    %1068 = vmatprep.subr.bf16.mxu0 %v600
    %1069 = vmatpush1.bf16.msra.mxu0 %v599
    %1070 = vmatprep.subr.bf16.mxu0 %v603
    %1071 = vmatpush1.bf16.msra.mxu0 %v602
    %1072 = vmatprep.subr.bf16.mxu0 %v606
    %1073 = vmatpush1.bf16.msra.mxu0 %v605
    %1074 = vmatprep.subr.bf16.mxu0 %v609
    %1075 = vmatpush1.bf16.msra.mxu0 %v608
    %1076 = vmatprep.subr.bf16.mxu0 0
    %1077 = vmatpush1.bf16.msra.mxu0 0
    %1078 = vmatprep.subr.bf16.mxu0 0
    %1079 = vmatpush1.bf16.msra.mxu0 0
    %1080 = vmatprep.subr.bf16.mxu0 0
    %1081 = vmatpush1.bf16.msra.mxu0 0
    %1082 = vmatprep.subr.bf16.mxu0 0
    %1083 = vmatpush1.bf16.msra.mxu0 0
    %1084 = vmatprep.subr.bf16.mxu0 0
    %1085 = vmatpush1.bf16.msra.mxu0 0
    %1086 = vmatprep.subr.bf16.mxu0 0
    %1087 = vmatpush1.bf16.msra.mxu0 0
    %1088 = vmatprep.subr.bf16.mxu0 0
    %1089 = vmatpush1.bf16.msra.mxu0 0
    %1090 = vmatprep.subr.bf16.mxu0 0
    %1091 = vmatpush1.bf16.msra.mxu0 0
    %1092 = vmatprep.mubr.bf16.mxu0 0
    %1093 = vmatmul.mubr.bf16.gmra.mrb[0].mxu0 %v1042
    %v1094 = vpop.f32.mrb[0].mxu0
    %v1095 = vadd.f32 0.0, %v1094
    %v1096 = vpop.f32.mrb[0].mxu0
    %v1097 = vadd.f32 0.0, %v1096
    %v1098 = vpop.f32.mrb[0].mxu0
    %v1099 = vadd.f32 0.0, %v1098
    %v1100 = vpop.f32.mrb[0].mxu0
    %v1101 = vadd.f32 0.0, %v1100
    %1102 = vdwg.mxu0
    %1103 = vmatprep.subr.bf16.mxu0 0
    %1104 = vmatpush1.bf16.msra.mxu0 %v589
    %1105 = vmatprep.subr.bf16.mxu0 0
    %1106 = vmatpush1.bf16.msra.mxu0 %v592
    %1107 = vmatprep.subr.bf16.mxu0 0
    %1108 = vmatpush1.bf16.msra.mxu0 %v595
    %1109 = vmatprep.subr.bf16.mxu0 0
    %1110 = vmatpush1.bf16.msra.mxu0 %v598
    %1111 = vmatprep.subr.bf16.mxu0 0
    %1112 = vmatpush1.bf16.msra.mxu0 %v601
    %1113 = vmatprep.subr.bf16.mxu0 0
    %1114 = vmatpush1.bf16.msra.mxu0 %v604
    %1115 = vmatprep.subr.bf16.mxu0 0
    %1116 = vmatpush1.bf16.msra.mxu0 %v607
    %1117 = vmatprep.subr.bf16.mxu0 0
    %1118 = vmatpush1.bf16.msra.mxu0 %v610
    %1119 = vmatprep.subr.bf16.mxu0 0
    %1120 = vmatpush1.bf16.msra.mxu0 0
    %1121 = vmatprep.subr.bf16.mxu0 0
    %1122 = vmatpush1.bf16.msra.mxu0 0
    %1123 = vmatprep.subr.bf16.mxu0 0
    %1124 = vmatpush1.bf16.msra.mxu0 0
    %1125 = vmatprep.subr.bf16.mxu0 0
    %1126 = vmatpush1.bf16.msra.mxu0 0
    %1127 = vmatprep.subr.bf16.mxu0 0
    %1128 = vmatpush1.bf16.msra.mxu0 0
    %1129 = vmatprep.subr.bf16.mxu0 0
    %1130 = vmatpush1.bf16.msra.mxu0 0
    %1131 = vmatprep.subr.bf16.mxu0 0
    %1132 = vmatpush1.bf16.msra.mxu0 0
    %1133 = vmatprep.subr.bf16.mxu0 0
    %1134 = vmatpush1.bf16.msra.mxu0 0
    %1135 = vmatprep.mubr.bf16.mxu0 0
    %1136 = vmatmul.mubr.bf16.gmra.mrb[0].mxu0 %v1042
    %v1137 = vpop.f32.mrb[0].mxu0
    %v1138 = vadd.f32 0.0, %v1137
    %v1139 = vpop.f32.mrb[0].mxu0
    %v1140 = vpop.f32.mrb[0].mxu0
    %v1141 = vadd.f32 0.0, %v1140
    %v1142 = vpop.f32.mrb[0].mxu0
    %1143 = vdwg.mxu0
    %v1144 = vadd.f32 %v1054, %v1095
    %v1145 = vadd.f32 %v1057, %v1099
    %v1146 = vxor.u32 %v1144, 2147483648
    %v1147 = vxor.u32 %v1145, 2147483648
    %v1148 = vmul.f32 %v1146, 1.442695
    %v1149 = vpow.pop %v1148
    %v1150 = vmul.f32 %v1147, 1.442695
    %v1151 = vpow.pop %v1150
    %v1152 = vadd.f32 %v1149, 1.0
    %v1153 = vadd.f32 %v1151, 1.0
    %v1154 = vrcp.pop %v1152
    %v1155 = vmul.f32 1.0, %v1154
    %v1156 = vrcp.pop %v1153
    %v1157 = vmul.f32 1.0, %v1156
    %v1158 = vadd.f32 %v1055, %v1097
    %v1159 = vadd.f32 %v1058, %v1101
    %v1160 = vxor.u32 %v1158, 2147483648
    %v1161 = vxor.u32 %v1159, 2147483648
    %v1162 = vmul.f32 %v1160, 1.442695
    %v1163 = vpow.pop %v1162
    %v1164 = vmul.f32 %v1161, 1.442695
    %v1165 = vpow.pop %v1164
    %v1166 = vadd.f32 %v1163, 1.0
    %v1167 = vadd.f32 %v1165, 1.0
    %v1168 = vrcp.pop %v1166
    %v1169 = vmul.f32 1.0, %v1168
    %v1170 = vrcp.pop %v1167
    %v1171 = vmul.f32 1.0, %v1170
    %v1172 = vmul.f32 %v1155, %v1138
    %v1173 = vmul.f32 %v1157, %v1141
    %v1174 = vadd.f32 %v1056, %v1172
    %v1175 = vadd.f32 %v1059, %v1173
    %v1176 = vtanh.pop %v1174
    %v1177 = vtanh.pop %v1175
    %v1178 = vsub.f32 %v1040, %v1176
    %v1179 = vsub.f32 %v1041, %v1177
    %v1180 = vmul.f32 %v1169, %v1178
    %v1181 = vmul.f32 %v1171, %v1179
    %v1182 = vadd.f32 %v1176, %v1180
    %v1183 = vadd.f32 %v1177, %v1181
    %v1184 = vpack.c.bf16 %v1183, %v1182
    %v1186 = vunpack.c.l.b16 %v1184
    %v1187 = vunpack.c.h.b16 %v1184
    %v1188 = vpack.c.b16 %v1186, %v1186
    %v1189 = vpack.c.b16 %v1187, %v1187
    %s1192 = scalar_lea.vmem [#allocation12], 24
    %1193 = vst [vmem:[%s1192] sm:$0xf] %v1188
    %1194 = vst [vmem:[%s1192 + $0x4] sm:$0xf] %v1189
    %s1195 = scalar_lea.vmem [#allocation3], 192
    %v1196 = vld [vmem:[%s1195] sm:$0xff]
    %v1197 = vld [vmem:[%s1195 + $0x8] sm:$0xff]
    %v1198 = vld [vmem:[%s1195 + $0x10] sm:$0xff]
    %v1199 = vld [vmem:[%s1195 + $0x18] sm:$0xff]
    %v1200 = vld [vmem:[%s1195 + $0x20] sm:$0xff]
    %v1201 = vld [vmem:[%s1195 + $0x28] sm:$0xff]
    %1202 = vmatprep.subr.bf16.mxu0 %v588
    %1203 = vmatpush1.bf16.msra.mxu0 %v587
    %1204 = vmatprep.subr.bf16.mxu0 %v591
    %1205 = vmatpush1.bf16.msra.mxu0 %v590
    %1206 = vmatprep.subr.bf16.mxu0 %v594
    %1207 = vmatpush1.bf16.msra.mxu0 %v593
    %1208 = vmatprep.subr.bf16.mxu0 %v597
    %1209 = vmatpush1.bf16.msra.mxu0 %v596
    %1210 = vmatprep.subr.bf16.mxu0 %v600
    %1211 = vmatpush1.bf16.msra.mxu0 %v599
    %1212 = vmatprep.subr.bf16.mxu0 %v603
    %1213 = vmatpush1.bf16.msra.mxu0 %v602
    %1214 = vmatprep.subr.bf16.mxu0 %v606
    %1215 = vmatpush1.bf16.msra.mxu0 %v605
    %1216 = vmatprep.subr.bf16.mxu0 %v609
    %1217 = vmatpush1.bf16.msra.mxu0 %v608
    %1218 = vmatprep.subr.bf16.mxu0 0
    %1219 = vmatpush1.bf16.msra.mxu0 0
    %1220 = vmatprep.subr.bf16.mxu0 0
    %1221 = vmatpush1.bf16.msra.mxu0 0
    %1222 = vmatprep.subr.bf16.mxu0 0
    %1223 = vmatpush1.bf16.msra.mxu0 0
    %1224 = vmatprep.subr.bf16.mxu0 0
    %1225 = vmatpush1.bf16.msra.mxu0 0
    %1226 = vmatprep.subr.bf16.mxu0 0
    %1227 = vmatpush1.bf16.msra.mxu0 0
    %1228 = vmatprep.subr.bf16.mxu0 0
    %1229 = vmatpush1.bf16.msra.mxu0 0
    %1230 = vmatprep.subr.bf16.mxu0 0
    %1231 = vmatpush1.bf16.msra.mxu0 0
    %1232 = vmatprep.subr.bf16.mxu0 0
    %1233 = vmatpush1.bf16.msra.mxu0 0
    %1234 = vmatprep.mubr.bf16.mxu0 0
    %1235 = vmatmul.mubr.bf16.gmra.mrb[0].mxu0 %v1184
    %v1236 = vpop.f32.mrb[0].mxu0
    %v1237 = vadd.f32 0.0, %v1236
    %v1238 = vpop.f32.mrb[0].mxu0
    %v1239 = vadd.f32 0.0, %v1238
    %v1240 = vpop.f32.mrb[0].mxu0
    %v1241 = vadd.f32 0.0, %v1240
    %v1242 = vpop.f32.mrb[0].mxu0
    %v1243 = vadd.f32 0.0, %v1242
    %1244 = vdwg.mxu0
    %1245 = vmatprep.subr.bf16.mxu0 0
    %1246 = vmatpush1.bf16.msra.mxu0 %v589
    %1247 = vmatprep.subr.bf16.mxu0 0
    %1248 = vmatpush1.bf16.msra.mxu0 %v592
    %1249 = vmatprep.subr.bf16.mxu0 0
    %1250 = vmatpush1.bf16.msra.mxu0 %v595
    %1251 = vmatprep.subr.bf16.mxu0 0
    %1252 = vmatpush1.bf16.msra.mxu0 %v598
    %1253 = vmatprep.subr.bf16.mxu0 0
    %1254 = vmatpush1.bf16.msra.mxu0 %v601
    %1255 = vmatprep.subr.bf16.mxu0 0
    %1256 = vmatpush1.bf16.msra.mxu0 %v604
    %1257 = vmatprep.subr.bf16.mxu0 0
    %1258 = vmatpush1.bf16.msra.mxu0 %v607
    %1259 = vmatprep.subr.bf16.mxu0 0
    %1260 = vmatpush1.bf16.msra.mxu0 %v610
    %1261 = vmatprep.subr.bf16.mxu0 0
    %1262 = vmatpush1.bf16.msra.mxu0 0
    %1263 = vmatprep.subr.bf16.mxu0 0
    %1264 = vmatpush1.bf16.msra.mxu0 0
    %1265 = vmatprep.subr.bf16.mxu0 0
    %1266 = vmatpush1.bf16.msra.mxu0 0
    %1267 = vmatprep.subr.bf16.mxu0 0
    %1268 = vmatpush1.bf16.msra.mxu0 0
    %1269 = vmatprep.subr.bf16.mxu0 0
    %1270 = vmatpush1.bf16.msra.mxu0 0
    %1271 = vmatprep.subr.bf16.mxu0 0
    %1272 = vmatpush1.bf16.msra.mxu0 0
    %1273 = vmatprep.subr.bf16.mxu0 0
    %1274 = vmatpush1.bf16.msra.mxu0 0
    %1275 = vmatprep.subr.bf16.mxu0 0
    %1276 = vmatpush1.bf16.msra.mxu0 0
    %1277 = vmatprep.mubr.bf16.mxu0 0
    %1278 = vmatmul.mubr.bf16.gmra.mrb[0].mxu0 %v1184
    %v1279 = vpop.f32.mrb[0].mxu0
    %v1280 = vadd.f32 0.0, %v1279
    %v1281 = vpop.f32.mrb[0].mxu0
    %v1282 = vpop.f32.mrb[0].mxu0
    %v1283 = vadd.f32 0.0, %v1282
    %v1284 = vpop.f32.mrb[0].mxu0
    %1285 = vdwg.mxu0
    %v1286 = vadd.f32 %v1196, %v1237
    %v1287 = vadd.f32 %v1199, %v1241
    %v1288 = vxor.u32 %v1286, 2147483648
    %v1289 = vxor.u32 %v1287, 2147483648
    %v1290 = vmul.f32 %v1288, 1.442695
    %v1291 = vpow.pop %v1290
    %v1292 = vmul.f32 %v1289, 1.442695
    %v1293 = vpow.pop %v1292
    %v1294 = vadd.f32 %v1291, 1.0
    %v1295 = vadd.f32 %v1293, 1.0
    %v1296 = vrcp.pop %v1294
    %v1297 = vmul.f32 1.0, %v1296
    %v1298 = vrcp.pop %v1295
    %v1299 = vmul.f32 1.0, %v1298
    %v1300 = vadd.f32 %v1197, %v1239
    %v1301 = vadd.f32 %v1200, %v1243
    %v1302 = vxor.u32 %v1300, 2147483648
    %v1303 = vxor.u32 %v1301, 2147483648
    %v1304 = vmul.f32 %v1302, 1.442695
    %v1305 = vpow.pop %v1304
    %v1306 = vmul.f32 %v1303, 1.442695
    %v1307 = vpow.pop %v1306
    %v1308 = vadd.f32 %v1305, 1.0
    %v1309 = vadd.f32 %v1307, 1.0
    %v1310 = vrcp.pop %v1308
    %v1311 = vmul.f32 1.0, %v1310
    %v1312 = vrcp.pop %v1309
    %v1313 = vmul.f32 1.0, %v1312
    %v1314 = vmul.f32 %v1297, %v1280
    %v1315 = vmul.f32 %v1299, %v1283
    %v1316 = vadd.f32 %v1198, %v1314
    %v1317 = vadd.f32 %v1201, %v1315
    %v1318 = vtanh.pop %v1316
    %v1319 = vtanh.pop %v1317
    %v1320 = vsub.f32 %v1182, %v1318
    %v1321 = vsub.f32 %v1183, %v1319
    %v1322 = vmul.f32 %v1311, %v1320
    %v1323 = vmul.f32 %v1313, %v1321
    %v1324 = vadd.f32 %v1318, %v1322
    %v1325 = vadd.f32 %v1319, %v1323
    %v1326 = vpack.c.bf16 %v1325, %v1324
    %v1328 = vunpack.c.l.b16 %v1326
    %v1329 = vunpack.c.h.b16 %v1326
    %v1330 = vpack.c.b16 %v1328, %v1328
    %v1331 = vpack.c.b16 %v1329, %v1329
    %s1334 = scalar_lea.vmem [#allocation12], 32
    %1335 = vst [vmem:[%s1334] sm:$0xf] %v1330
    %1336 = vst [vmem:[%s1334 + $0x4] sm:$0xf] %v1331
    %s1337 = scalar_lea.vmem [#allocation3], 240
    %v1338 = vld [vmem:[%s1337] sm:$0xff]
    %v1339 = vld [vmem:[%s1337 + $0x8] sm:$0xff]
    %v1340 = vld [vmem:[%s1337 + $0x10] sm:$0xff]
    %v1341 = vld [vmem:[%s1337 + $0x18] sm:$0xff]
    %v1342 = vld [vmem:[%s1337 + $0x20] sm:$0xff]
    %v1343 = vld [vmem:[%s1337 + $0x28] sm:$0xff]
    %1344 = vmatprep.subr.bf16.mxu0 %v588
    %1345 = vmatpush1.bf16.msra.mxu0 %v587
    %1346 = vmatprep.subr.bf16.mxu0 %v591
    %1347 = vmatpush1.bf16.msra.mxu0 %v590
    %1348 = vmatprep.subr.bf16.mxu0 %v594
    %1349 = vmatpush1.bf16.msra.mxu0 %v593
    %1350 = vmatprep.subr.bf16.mxu0 %v597
    %1351 = vmatpush1.bf16.msra.mxu0 %v596
    %1352 = vmatprep.subr.bf16.mxu0 %v600
    %1353 = vmatpush1.bf16.msra.mxu0 %v599
    %1354 = vmatprep.subr.bf16.mxu0 %v603
    %1355 = vmatpush1.bf16.msra.mxu0 %v602
    %1356 = vmatprep.subr.bf16.mxu0 %v606
    %1357 = vmatpush1.bf16.msra.mxu0 %v605
    %1358 = vmatprep.subr.bf16.mxu0 %v609
    %1359 = vmatpush1.bf16.msra.mxu0 %v608
    %1360 = vmatprep.subr.bf16.mxu0 0
    %1361 = vmatpush1.bf16.msra.mxu0 0
    %1362 = vmatprep.subr.bf16.mxu0 0
    %1363 = vmatpush1.bf16.msra.mxu0 0
    %1364 = vmatprep.subr.bf16.mxu0 0
    %1365 = vmatpush1.bf16.msra.mxu0 0
    %1366 = vmatprep.subr.bf16.mxu0 0
    %1367 = vmatpush1.bf16.msra.mxu0 0
    %1368 = vmatprep.subr.bf16.mxu0 0
    %1369 = vmatpush1.bf16.msra.mxu0 0
    %1370 = vmatprep.subr.bf16.mxu0 0
    %1371 = vmatpush1.bf16.msra.mxu0 0
    %1372 = vmatprep.subr.bf16.mxu0 0
    %1373 = vmatpush1.bf16.msra.mxu0 0
    %1374 = vmatprep.subr.bf16.mxu0 0
    %1375 = vmatpush1.bf16.msra.mxu0 0
    %1376 = vmatprep.mubr.bf16.mxu0 0
    %1377 = vmatmul.mubr.bf16.gmra.mrb[0].mxu0 %v1326
    %v1378 = vpop.f32.mrb[0].mxu0
    %v1379 = vadd.f32 0.0, %v1378
    %v1380 = vpop.f32.mrb[0].mxu0
    %v1381 = vadd.f32 0.0, %v1380
    %v1382 = vpop.f32.mrb[0].mxu0
    %v1383 = vadd.f32 0.0, %v1382
    %v1384 = vpop.f32.mrb[0].mxu0
    %v1385 = vadd.f32 0.0, %v1384
    %1386 = vdwg.mxu0
    %1387 = vmatprep.subr.bf16.mxu0 0
    %1388 = vmatpush1.bf16.msra.mxu0 %v589
    %1389 = vmatprep.subr.bf16.mxu0 0
    %1390 = vmatpush1.bf16.msra.mxu0 %v592
    %1391 = vmatprep.subr.bf16.mxu0 0
    %1392 = vmatpush1.bf16.msra.mxu0 %v595
    %1393 = vmatprep.subr.bf16.mxu0 0
    %1394 = vmatpush1.bf16.msra.mxu0 %v598
    %1395 = vmatprep.subr.bf16.mxu0 0
    %1396 = vmatpush1.bf16.msra.mxu0 %v601
    %1397 = vmatprep.subr.bf16.mxu0 0
    %1398 = vmatpush1.bf16.msra.mxu0 %v604
    %1399 = vmatprep.subr.bf16.mxu0 0
    %1400 = vmatpush1.bf16.msra.mxu0 %v607
    %1401 = vmatprep.subr.bf16.mxu0 0
    %1402 = vmatpush1.bf16.msra.mxu0 %v610
    %1403 = vmatprep.subr.bf16.mxu0 0
    %1404 = vmatpush1.bf16.msra.mxu0 0
    %1405 = vmatprep.subr.bf16.mxu0 0
    %1406 = vmatpush1.bf16.msra.mxu0 0
    %1407 = vmatprep.subr.bf16.mxu0 0
    %1408 = vmatpush1.bf16.msra.mxu0 0
    %1409 = vmatprep.subr.bf16.mxu0 0
    %1410 = vmatpush1.bf16.msra.mxu0 0
    %1411 = vmatprep.subr.bf16.mxu0 0
    %1412 = vmatpush1.bf16.msra.mxu0 0
    %1413 = vmatprep.subr.bf16.mxu0 0
    %1414 = vmatpush1.bf16.msra.mxu0 0
    %1415 = vmatprep.subr.bf16.mxu0 0
    %1416 = vmatpush1.bf16.msra.mxu0 0
    %1417 = vmatprep.subr.bf16.mxu0 0
    %1418 = vmatpush1.bf16.msra.mxu0 0
    %1419 = vmatprep.mubr.bf16.mxu0 0
    %1420 = vmatmul.mubr.bf16.gmra.mrb[0].mxu0 %v1326
    %v1421 = vpop.f32.mrb[0].mxu0
    %v1422 = vadd.f32 0.0, %v1421
    %v1423 = vpop.f32.mrb[0].mxu0
    %v1424 = vpop.f32.mrb[0].mxu0
    %v1425 = vadd.f32 0.0, %v1424
    %v1426 = vpop.f32.mrb[0].mxu0
    %1427 = vdwg.mxu0
    %v1428 = vadd.f32 %v1338, %v1379
    %v1429 = vadd.f32 %v1341, %v1383
    %v1430 = vxor.u32 %v1428, 2147483648
    %v1431 = vxor.u32 %v1429, 2147483648
    %v1432 = vmul.f32 %v1430, 1.442695
    %v1433 = vpow.pop %v1432
    %v1434 = vmul.f32 %v1431, 1.442695
    %v1435 = vpow.pop %v1434
    %v1436 = vadd.f32 %v1433, 1.0
    %v1437 = vadd.f32 %v1435, 1.0
    %v1438 = vrcp.pop %v1436
    %v1439 = vmul.f32 1.0, %v1438
    %v1440 = vrcp.pop %v1437
    %v1441 = vmul.f32 1.0, %v1440
    %v1442 = vadd.f32 %v1339, %v1381
    %v1443 = vadd.f32 %v1342, %v1385
    %v1444 = vxor.u32 %v1442, 2147483648
    %v1445 = vxor.u32 %v1443, 2147483648
    %v1446 = vmul.f32 %v1444, 1.442695
    %v1447 = vpow.pop %v1446
    %v1448 = vmul.f32 %v1445, 1.442695
    %v1449 = vpow.pop %v1448
    %v1450 = vadd.f32 %v1447, 1.0
    %v1451 = vadd.f32 %v1449, 1.0
    %v1452 = vrcp.pop %v1450
    %v1453 = vmul.f32 1.0, %v1452
    %v1454 = vrcp.pop %v1451
    %v1455 = vmul.f32 1.0, %v1454
    %v1456 = vmul.f32 %v1439, %v1422
    %v1457 = vmul.f32 %v1441, %v1425
    %v1458 = vadd.f32 %v1340, %v1456
    %v1459 = vadd.f32 %v1343, %v1457
    %v1460 = vtanh.pop %v1458
    %v1461 = vtanh.pop %v1459
    %v1462 = vsub.f32 %v1324, %v1460
    %v1463 = vsub.f32 %v1325, %v1461
    %v1464 = vmul.f32 %v1453, %v1462
    %v1465 = vmul.f32 %v1455, %v1463
    %v1466 = vadd.f32 %v1460, %v1464
    %v1467 = vadd.f32 %v1461, %v1465
    %v1468 = vpack.c.bf16 %v1467, %v1466
    %v1470 = vunpack.c.l.b16 %v1468
    %v1471 = vunpack.c.h.b16 %v1468
    %v1472 = vpack.c.b16 %v1470, %v1470
    %v1473 = vpack.c.b16 %v1471, %v1471
    %s1476 = scalar_lea.vmem [#allocation12], 40
    %1477 = vst [vmem:[%s1476] sm:$0xf] %v1472
    %1478 = vst [vmem:[%s1476 + $0x4] sm:$0xf] %v1473
    %s1479 = scalar_lea.vmem [#allocation3], 288
    %v1480 = vld [vmem:[%s1479] sm:$0xff]
    %v1481 = vld [vmem:[%s1479 + $0x8] sm:$0xff]
    %v1482 = vld [vmem:[%s1479 + $0x10] sm:$0xff]
    %v1483 = vld [vmem:[%s1479 + $0x18] sm:$0xff]
    %v1484 = vld [vmem:[%s1479 + $0x20] sm:$0xff]
    %v1485 = vld [vmem:[%s1479 + $0x28] sm:$0xff]
    %1486 = vmatprep.subr.bf16.mxu0 %v588
    %1487 = vmatpush1.bf16.msra.mxu0 %v587
    %1488 = vmatprep.subr.bf16.mxu0 %v591
    %1489 = vmatpush1.bf16.msra.mxu0 %v590
    %1490 = vmatprep.subr.bf16.mxu0 %v594
    %1491 = vmatpush1.bf16.msra.mxu0 %v593
    %1492 = vmatprep.subr.bf16.mxu0 %v597
    %1493 = vmatpush1.bf16.msra.mxu0 %v596
    %1494 = vmatprep.subr.bf16.mxu0 %v600
    %1495 = vmatpush1.bf16.msra.mxu0 %v599
    %1496 = vmatprep.subr.bf16.mxu0 %v603
    %1497 = vmatpush1.bf16.msra.mxu0 %v602
    %1498 = vmatprep.subr.bf16.mxu0 %v606
    %1499 = vmatpush1.bf16.msra.mxu0 %v605
    %1500 = vmatprep.subr.bf16.mxu0 %v609
    %1501 = vmatpush1.bf16.msra.mxu0 %v608
    %1502 = vmatprep.subr.bf16.mxu0 0
    %1503 = vmatpush1.bf16.msra.mxu0 0
    %1504 = vmatprep.subr.bf16.mxu0 0
    %1505 = vmatpush1.bf16.msra.mxu0 0
    %1506 = vmatprep.subr.bf16.mxu0 0
    %1507 = vmatpush1.bf16.msra.mxu0 0
    %1508 = vmatprep.subr.bf16.mxu0 0
    %1509 = vmatpush1.bf16.msra.mxu0 0
    %1510 = vmatprep.subr.bf16.mxu0 0
    %1511 = vmatpush1.bf16.msra.mxu0 0
    %1512 = vmatprep.subr.bf16.mxu0 0
    %1513 = vmatpush1.bf16.msra.mxu0 0
    %1514 = vmatprep.subr.bf16.mxu0 0
    %1515 = vmatpush1.bf16.msra.mxu0 0
    %1516 = vmatprep.subr.bf16.mxu0 0
    %1517 = vmatpush1.bf16.msra.mxu0 0
    %1518 = vmatprep.mubr.bf16.mxu0 0
    %1519 = vmatmul.mubr.bf16.gmra.mrb[0].mxu0 %v1468
    %v1520 = vpop.f32.mrb[0].mxu0
    %v1521 = vadd.f32 0.0, %v1520
    %v1522 = vpop.f32.mrb[0].mxu0
    %v1523 = vadd.f32 0.0, %v1522
    %v1524 = vpop.f32.mrb[0].mxu0
    %v1525 = vadd.f32 0.0, %v1524
    %v1526 = vpop.f32.mrb[0].mxu0
    %v1527 = vadd.f32 0.0, %v1526
    %1528 = vdwg.mxu0
    %1529 = vmatprep.subr.bf16.mxu0 0
    %1530 = vmatpush1.bf16.msra.mxu0 %v589
    %1531 = vmatprep.subr.bf16.mxu0 0
    %1532 = vmatpush1.bf16.msra.mxu0 %v592
    %1533 = vmatprep.subr.bf16.mxu0 0
    %1534 = vmatpush1.bf16.msra.mxu0 %v595
    %1535 = vmatprep.subr.bf16.mxu0 0
    %1536 = vmatpush1.bf16.msra.mxu0 %v598
    %1537 = vmatprep.subr.bf16.mxu0 0
    %1538 = vmatpush1.bf16.msra.mxu0 %v601
    %1539 = vmatprep.subr.bf16.mxu0 0
    %1540 = vmatpush1.bf16.msra.mxu0 %v604
    %1541 = vmatprep.subr.bf16.mxu0 0
    %1542 = vmatpush1.bf16.msra.mxu0 %v607
    %1543 = vmatprep.subr.bf16.mxu0 0
    %1544 = vmatpush1.bf16.msra.mxu0 %v610
    %1545 = vmatprep.subr.bf16.mxu0 0
    %1546 = vmatpush1.bf16.msra.mxu0 0
    %1547 = vmatprep.subr.bf16.mxu0 0
    %1548 = vmatpush1.bf16.msra.mxu0 0
    %1549 = vmatprep.subr.bf16.mxu0 0
    %1550 = vmatpush1.bf16.msra.mxu0 0
    %1551 = vmatprep.subr.bf16.mxu0 0
    %1552 = vmatpush1.bf16.msra.mxu0 0
    %1553 = vmatprep.subr.bf16.mxu0 0
    %1554 = vmatpush1.bf16.msra.mxu0 0
    %1555 = vmatprep.subr.bf16.mxu0 0
    %1556 = vmatpush1.bf16.msra.mxu0 0
    %1557 = vmatprep.subr.bf16.mxu0 0
    %1558 = vmatpush1.bf16.msra.mxu0 0
    %1559 = vmatprep.subr.bf16.mxu0 0
    %1560 = vmatpush1.bf16.msra.mxu0 0
    %1561 = vmatprep.mubr.bf16.mxu0 0
    %1562 = vmatmul.mubr.bf16.gmra.mrb[0].mxu0 %v1468
    %v1563 = vpop.f32.mrb[0].mxu0
    %v1564 = vadd.f32 0.0, %v1563
    %v1565 = vpop.f32.mrb[0].mxu0
    %v1566 = vpop.f32.mrb[0].mxu0
    %v1567 = vadd.f32 0.0, %v1566
    %v1568 = vpop.f32.mrb[0].mxu0
    %1569 = vdwg.mxu0
    %v1570 = vadd.f32 %v1480, %v1521
    %v1571 = vadd.f32 %v1483, %v1525
    %v1572 = vxor.u32 %v1570, 2147483648
    %v1573 = vxor.u32 %v1571, 2147483648
    %v1574 = vmul.f32 %v1572, 1.442695
    %v1575 = vpow.pop %v1574
    %v1576 = vmul.f32 %v1573, 1.442695
    %v1577 = vpow.pop %v1576
    %v1578 = vadd.f32 %v1575, 1.0
    %v1579 = vadd.f32 %v1577, 1.0
    %v1580 = vrcp.pop %v1578
    %v1581 = vmul.f32 1.0, %v1580
    %v1582 = vrcp.pop %v1579
    %v1583 = vmul.f32 1.0, %v1582
    %v1584 = vadd.f32 %v1481, %v1523
    %v1585 = vadd.f32 %v1484, %v1527
    %v1586 = vxor.u32 %v1584, 2147483648
    %v1587 = vxor.u32 %v1585, 2147483648
    %v1588 = vmul.f32 %v1586, 1.442695
    %v1589 = vpow.pop %v1588
    %v1590 = vmul.f32 %v1587, 1.442695
    %v1591 = vpow.pop %v1590
    %v1592 = vadd.f32 %v1589, 1.0
    %v1593 = vadd.f32 %v1591, 1.0
    %v1594 = vrcp.pop %v1592
    %v1595 = vmul.f32 1.0, %v1594
    %v1596 = vrcp.pop %v1593
    %v1597 = vmul.f32 1.0, %v1596
    %v1598 = vmul.f32 %v1581, %v1564
    %v1599 = vmul.f32 %v1583, %v1567
    %v1600 = vadd.f32 %v1482, %v1598
    %v1601 = vadd.f32 %v1485, %v1599
    %v1602 = vtanh.pop %v1600
    %v1603 = vtanh.pop %v1601
    %v1604 = vsub.f32 %v1466, %v1602
    %v1605 = vsub.f32 %v1467, %v1603
    %v1606 = vmul.f32 %v1595, %v1604
    %v1607 = vmul.f32 %v1597, %v1605
    %v1608 = vadd.f32 %v1602, %v1606
    %v1609 = vadd.f32 %v1603, %v1607
    %v1610 = vpack.c.bf16 %v1609, %v1608
    %v1612 = vunpack.c.l.b16 %v1610
    %v1613 = vunpack.c.h.b16 %v1610
    %v1614 = vpack.c.b16 %v1612, %v1612
    %v1615 = vpack.c.b16 %v1613, %v1613
    %s1618 = scalar_lea.vmem [#allocation12], 48
    %1619 = vst [vmem:[%s1618] sm:$0xf] %v1614
    %1620 = vst [vmem:[%s1618 + $0x4] sm:$0xf] %v1615
    %s1621 = scalar_lea.vmem [#allocation3], 336
    %v1622 = vld [vmem:[%s1621] sm:$0xff]
    %v1623 = vld [vmem:[%s1621 + $0x8] sm:$0xff]
    %v1624 = vld [vmem:[%s1621 + $0x10] sm:$0xff]
    %v1625 = vld [vmem:[%s1621 + $0x18] sm:$0xff]
    %v1626 = vld [vmem:[%s1621 + $0x20] sm:$0xff]
    %v1627 = vld [vmem:[%s1621 + $0x28] sm:$0xff]
    %1628 = vmatprep.subr.bf16.mxu0 %v588
    %1629 = vmatpush1.bf16.msra.mxu0 %v587
    %1630 = vmatprep.subr.bf16.mxu0 %v591
    %1631 = vmatpush1.bf16.msra.mxu0 %v590
    %1632 = vmatprep.subr.bf16.mxu0 %v594
    %1633 = vmatpush1.bf16.msra.mxu0 %v593
    %1634 = vmatprep.subr.bf16.mxu0 %v597
    %1635 = vmatpush1.bf16.msra.mxu0 %v596
    %1636 = vmatprep.subr.bf16.mxu0 %v600
    %1637 = vmatpush1.bf16.msra.mxu0 %v599
    %1638 = vmatprep.subr.bf16.mxu0 %v603
    %1639 = vmatpush1.bf16.msra.mxu0 %v602
    %1640 = vmatprep.subr.bf16.mxu0 %v606
    %1641 = vmatpush1.bf16.msra.mxu0 %v605
    %1642 = vmatprep.subr.bf16.mxu0 %v609
    %1643 = vmatpush1.bf16.msra.mxu0 %v608
    %1644 = vmatprep.subr.bf16.mxu0 0
    %1645 = vmatpush1.bf16.msra.mxu0 0
    %1646 = vmatprep.subr.bf16.mxu0 0
    %1647 = vmatpush1.bf16.msra.mxu0 0
    %1648 = vmatprep.subr.bf16.mxu0 0
    %1649 = vmatpush1.bf16.msra.mxu0 0
    %1650 = vmatprep.subr.bf16.mxu0 0
    %1651 = vmatpush1.bf16.msra.mxu0 0
    %1652 = vmatprep.subr.bf16.mxu0 0
    %1653 = vmatpush1.bf16.msra.mxu0 0
    %1654 = vmatprep.subr.bf16.mxu0 0
    %1655 = vmatpush1.bf16.msra.mxu0 0
    %1656 = vmatprep.subr.bf16.mxu0 0
    %1657 = vmatpush1.bf16.msra.mxu0 0
    %1658 = vmatprep.subr.bf16.mxu0 0
    %1659 = vmatpush1.bf16.msra.mxu0 0
    %1660 = vmatprep.mubr.bf16.mxu0 0
    %1661 = vmatmul.mubr.bf16.gmra.mrb[0].mxu0 %v1610
    %v1662 = vpop.f32.mrb[0].mxu0
    %v1663 = vadd.f32 0.0, %v1662
    %v1664 = vpop.f32.mrb[0].mxu0
    %v1665 = vadd.f32 0.0, %v1664
    %v1666 = vpop.f32.mrb[0].mxu0
    %v1667 = vadd.f32 0.0, %v1666
    %v1668 = vpop.f32.mrb[0].mxu0
    %v1669 = vadd.f32 0.0, %v1668
    %1670 = vdwg.mxu0
    %1671 = vmatprep.subr.bf16.mxu0 0
    %1672 = vmatpush1.bf16.msra.mxu0 %v589
    %1673 = vmatprep.subr.bf16.mxu0 0
    %1674 = vmatpush1.bf16.msra.mxu0 %v592
    %1675 = vmatprep.subr.bf16.mxu0 0
    %1676 = vmatpush1.bf16.msra.mxu0 %v595
    %1677 = vmatprep.subr.bf16.mxu0 0
    %1678 = vmatpush1.bf16.msra.mxu0 %v598
    %1679 = vmatprep.subr.bf16.mxu0 0
    %1680 = vmatpush1.bf16.msra.mxu0 %v601
    %1681 = vmatprep.subr.bf16.mxu0 0
    %1682 = vmatpush1.bf16.msra.mxu0 %v604
    %1683 = vmatprep.subr.bf16.mxu0 0
    %1684 = vmatpush1.bf16.msra.mxu0 %v607
    %1685 = vmatprep.subr.bf16.mxu0 0
    %1686 = vmatpush1.bf16.msra.mxu0 %v610
    %1687 = vmatprep.subr.bf16.mxu0 0
    %1688 = vmatpush1.bf16.msra.mxu0 0
    %1689 = vmatprep.subr.bf16.mxu0 0
    %1690 = vmatpush1.bf16.msra.mxu0 0
    %1691 = vmatprep.subr.bf16.mxu0 0
    %1692 = vmatpush1.bf16.msra.mxu0 0
    %1693 = vmatprep.subr.bf16.mxu0 0
    %1694 = vmatpush1.bf16.msra.mxu0 0
    %1695 = vmatprep.subr.bf16.mxu0 0
    %1696 = vmatpush1.bf16.msra.mxu0 0
    %1697 = vmatprep.subr.bf16.mxu0 0
    %1698 = vmatpush1.bf16.msra.mxu0 0
    %1699 = vmatprep.subr.bf16.mxu0 0
    %1700 = vmatpush1.bf16.msra.mxu0 0
    %1701 = vmatprep.subr.bf16.mxu0 0
    %1702 = vmatpush1.bf16.msra.mxu0 0
    %1703 = vmatprep.mubr.bf16.mxu0 0
    %1704 = vmatmul.mubr.bf16.gmra.mrb[0].mxu0 %v1610
    %v1705 = vpop.f32.mrb[0].mxu0
    %v1706 = vadd.f32 0.0, %v1705
    %v1707 = vpop.f32.mrb[0].mxu0
    %v1708 = vpop.f32.mrb[0].mxu0
    %v1709 = vadd.f32 0.0, %v1708
    %v1710 = vpop.f32.mrb[0].mxu0
    %1711 = vdwg.mxu0
    %v1712 = vadd.f32 %v1622, %v1663
    %v1713 = vadd.f32 %v1625, %v1667
    %v1714 = vxor.u32 %v1712, 2147483648
    %v1715 = vxor.u32 %v1713, 2147483648
    %v1716 = vmul.f32 %v1714, 1.442695
    %v1717 = vpow.pop %v1716
    %v1718 = vmul.f32 %v1715, 1.442695
    %v1719 = vpow.pop %v1718
    %v1720 = vadd.f32 %v1717, 1.0
    %v1721 = vadd.f32 %v1719, 1.0
    %v1722 = vrcp.pop %v1720
    %v1723 = vmul.f32 1.0, %v1722
    %v1724 = vrcp.pop %v1721
    %v1725 = vmul.f32 1.0, %v1724
    %v1726 = vadd.f32 %v1623, %v1665
    %v1727 = vadd.f32 %v1626, %v1669
    %v1728 = vxor.u32 %v1726, 2147483648
    %v1729 = vxor.u32 %v1727, 2147483648
    %v1730 = vmul.f32 %v1728, 1.442695
    %v1731 = vpow.pop %v1730
    %v1732 = vmul.f32 %v1729, 1.442695
    %v1733 = vpow.pop %v1732
    %v1734 = vadd.f32 %v1731, 1.0
    %v1735 = vadd.f32 %v1733, 1.0
    %v1736 = vrcp.pop %v1734
    %v1737 = vmul.f32 1.0, %v1736
    %v1738 = vrcp.pop %v1735
    %v1739 = vmul.f32 1.0, %v1738
    %v1740 = vmul.f32 %v1723, %v1706
    %v1741 = vmul.f32 %v1725, %v1709
    %v1742 = vadd.f32 %v1624, %v1740
    %v1743 = vadd.f32 %v1627, %v1741
    %v1744 = vtanh.pop %v1742
    %v1745 = vtanh.pop %v1743
    %v1746 = vsub.f32 %v1608, %v1744
    %v1747 = vsub.f32 %v1609, %v1745
    %v1748 = vmul.f32 %v1737, %v1746
    %v1749 = vmul.f32 %v1739, %v1747
    %v1750 = vadd.f32 %v1744, %v1748
    %v1751 = vadd.f32 %v1745, %v1749
    %v1752 = vpack.c.bf16 %v1751, %v1750
    %v1754 = vunpack.c.l.b16 %v1752
    %v1755 = vunpack.c.h.b16 %v1752
    %v1756 = vpack.c.b16 %v1754, %v1754
    %v1757 = vpack.c.b16 %v1755, %v1755
    %s1760 = scalar_lea.vmem [#allocation12], 56
    %1761 = vst [vmem:[%s1760] sm:$0xf] %v1756
    %1762 = vst [vmem:[%s1760 + $0x4] sm:$0xf] %v1757
    %1763 = vst [vmem:[#allocation2] sm:$0xff] %v1750
    %1764 = vst [vmem:[#allocation2 + $0x8] sm:$0xff] %v1751
    // Predicated region
    $region42: #{tpu_custom_call.1} parent=1 // pred_check
      _
    $region43: #{tpu_custom_call.1} parent=1 // pred_check_branch
      %1766 = sbr.rel (0) target = $region45
    $region44: #{tpu_custom_call.1} parent=1 // pred_region
      %s1768 = ssub.s32 1024, 1024
      %1769 = vsyncadd [#allocation6], %s1768
      %s1770 = sshll.u32 [#allocation12], 4
      %s1771 = int_to_ptr.vmem [resolvable:$true] %s1770
      %1776 = dma.vmem_to_hbm [thread:$0]  %s1771, 1024, %s5, [#allocation6], 64, 64, 4
    $region45: #{tpu_custom_call.1} parent=1 // pred_fallthru
      _
    // Predicated region
    $region46: #{tpu_custom_call.1} parent=1 // pred_check
      _
    $region47: #{tpu_custom_call.1} parent=1 // pred_check_branch
      %1778 = sbr.rel (0) target = $region49
    $region48: #{tpu_custom_call.1} parent=1 // pred_region
      %1779 = dma.done [#allocation6], 1024
    $region49: #{tpu_custom_call.1} parent=1 // pred_fallthru
      _
    %1780 = vsyncpa [#allocation5], 1
    %1781 = vsyncpa [#allocation8], 1
    %1782 = vsyncpa [#allocation11], 1
    %1783 = vsyncpa [#allocation6], 1

</llo_original>
